<compile_context>
chip_gen: v5e
topology: v5e:2x2
jax: 0.10.0
libtpu: 0.0.40
codegen_flags: <defaults>
</compile_context>

<pallas_src>
import jax
import jax.numpy as jnp
import numpy as np
from jax.experimental import pallas as pl
from jax.experimental.pallas import tpu as pltpu

# Module config (PyTorch defaults: activation='relu', norm=None -> bias=True).
IN_CH, OUT_CH = 4, 8
K = 5            # kernel_size
PAD = 2          # padding
STRIDE = 2       # hard-coded in the module (stride=2)
OUT_PAD = 1      # hard-coded in the module (output_padding=1)

_PADL = 128      # flat zero-padding (lanes) on each side of the in-kernel image copy


def _build_fused_weight(weight_t):
    """(Cin, Cout, K, K) ConvTranspose weight -> fused 4-phase matrix (4*Cout, 9*Cin).

    Row index  = (r*2 + c)*Cout + co   (r, c = output row/col parity).
    Col index  = (e_idx*3 + d_idx)*Cin + ci, with input shifts e = 1 - e_idx,
                 d = 1 - d_idx (shifts in {+1, 0, -1}); tap (kh, kw) = (2*e_idx + r,
                 2*d_idx + c), zeroed when it falls outside the 5x5 kernel.
    (In a real model this tiny rearrangement would be precomputed once.)
    """
    Cin, Cout, k, _ = weight_t.shape
    assert k == K and PAD == 2, "fused-weight layout assumes kernel_size=5, padding=2"
    r, c, co, ei, di, ci = np.meshgrid(
        np.arange(2), np.arange(2), np.arange(Cout),
        np.arange(3), np.arange(3), np.arange(Cin), indexing="ij")
    kh = 2 * ei + r
    kw = 2 * di + c
    valid = (kh < K) & (kw < K)
    gathered = weight_t[ci, co, np.minimum(kh, K - 1), np.minimum(kw, K - 1)]
    w_fused = jnp.where(jnp.asarray(valid), gathered, 0.0)
    return w_fused.reshape(4 * Cout, 9 * Cin).astype(jnp.float32)


def _build_scatter_mats(H, W):
    """Constant 0/1 matrices (4, 32, 128) scattering phase results to NCHW-flat lanes.

    For every 128-lane output block B, lane f maps to output pixel
    (oy, ox) = divmod(128*B + f, Wo); its value lives in phase (r, c) = (oy%2, ox%2)
    at source lane W*(oy//2) + ox//2 - 32*B.  The map is identical for every B
    (requires 128 % Wo == 0 and an even number of output rows per block).
    """
    Wo = 2 * W
    n_blocks = (4 * H * W) // 128
    src_w = (H * W) // n_blocks
    m = np.zeros((4, src_w, 128), np.float32)
    for f in range(128):
        oy, ox = f // Wo, f % Wo
        py, r = oy // 2, oy % 2
        px, c = ox // 2, ox % 2
        m[2 * r + c, W * py + px, f] = 1.0
    return m


def _make_kernel(H, W, Cin, Cout):
    HW = H * W
    n_blocks = (4 * HW) // 128        # 128-lane output blocks per image (8)
    src_w = HW // n_blocks            # source lanes feeding each output block (32)

    def kernel(x_ref, w_ref, b_ref, m_ref, o_ref, xpad_ref, patch_ref):
        # x_ref:   (1, Cin, H*W)      NCHW-flat input image
        # w_ref:   (4*Cout, 9*Cin)    fused 4-phase weights
        # b_ref:   (4*Cout, 1)        bias replicated per phase
        # m_ref:   (4, 32, 128)       constant sub-pixel scatter matrices
        # o_ref:   (1, Cout, Ho*Wo)   NCHW-flat output image (lane-dense)
        # xpad_ref:(Cin, 2*_PADL+HW)  zero-padded flat image (scratch)
        # patch_ref:(9*Cin, HW)       im2col patch (scratch)

        # ---- zero-padded flat copy of the image (handles vertical out-of-range) ----
        xpad_ref[:, 0:_PADL] = jnp.zeros((Cin, _PADL), jnp.float32)
        xpad_ref[:, _PADL + HW:2 * _PADL + HW] = jnp.zeros((Cin, _PADL), jnp.float32)
        xpad_ref[:, _PADL:_PADL + HW] = x_ref[0]
        xp = xpad_ref[...]

        # ---- column-boundary masks for horizontal shifts d = +-1 (hoisted) ----
        col = jax.lax.broadcasted_iota(jnp.int32, (1, HW), 1) % W
        mask_pos = (col != (W - 1)).astype(jnp.float32)   # reads px+1: invalid at px=W-1
        mask_neg = (col != 0).astype(jnp.float32)         # reads px-1: invalid at px=0

        # ---- im2col patch: 9 (row, col) shifts x Cin channels, HW pixels ----
        idx = 0
        for e in (1, 0, -1):              # input row shift: iy = py + e
            for d in (1, 0, -1):          # input col shift: ix = px + d
                val = xp[:, _PADL + e * W + d:_PADL + e * W + d + HW]
                if d == 1:
                    val = val * mask_pos
                elif d == -1:
                    val = val * mask_neg
                patch_ref[Cin * idx:Cin * (idx + 1), :] = val
                idx += 1

        # ---- all 4 phases in one fat MXU matmul, then one bias+ReLU epilogue ----
        z = jnp.dot(w_ref[...], patch_ref[...],
                    preferred_element_type=jnp.float32)          # (4*Cout, HW)
        z = jnp.maximum(z + b_ref[...], 0.0)

        # ---- scatter (phase, py, px) -> NCHW-flat lanes via 0/1 permutation matmuls ----
        m00, m01, m10, m11 = m_ref[0], m_ref[1], m_ref[2], m_ref[3]
        for b in range(n_blocks):
            zsl = z[:, src_w * b:src_w * (b + 1)]                # (4*Cout, 32)
            yb = jnp.dot(zsl[0:Cout, :], m00, preferred_element_type=jnp.float32)
            yb = yb + jnp.dot(zsl[Cout:2 * Cout, :], m01,
                              preferred_element_type=jnp.float32)
            yb = yb + jnp.dot(zsl[2 * Cout:3 * Cout, :], m10,
                              preferred_element_type=jnp.float32)
            yb = yb + jnp.dot(zsl[3 * Cout:4 * Cout, :], m11,
                              preferred_element_type=jnp.float32)
            o_ref[0, :, 128 * b:128 * (b + 1)] = yb.astype(o_ref.dtype)  # full-vreg store

    return kernel


def transposed_conv_layer(x_nchw, weight_t, bias):
    """ConvTranspose2d(Cin, Cout, 5, stride=2, padding=2, output_padding=1) + ReLU.
    x_nchw: (N, Cin, H, W); weight_t: (Cin, Cout, K, K) (PyTorch layout); bias: (Cout,)."""
    N, Cin, H, W = x_nchw.shape
    Cout = weight_t.shape[1]
    Ho, Wo = 2 * H, 2 * W
    assert weight_t.shape[2] == K and weight_t.shape[3] == K
    assert (Ho * Wo) % 128 == 0 and 128 % Wo == 0 and (128 // Wo) % 2 == 0
    assert _PADL >= W + 1

    # Wrapper-side work is only free reshapes + tiny one-time parameter rearrangement.
    x_flat = x_nchw.reshape(N, Cin, H * W)                       # free (contiguous)
    w_fused = _build_fused_weight(weight_t)                      # (4*Cout, 9*Cin)
    b_col = jnp.tile(bias.astype(jnp.float32), 4).reshape(4 * Cout, 1)
    m_perm = jnp.asarray(_build_scatter_mats(H, W))              # (4, 32, 128) constant

    kernel = _make_kernel(H, W, Cin, Cout)
    out_flat = pl.pallas_call(
        kernel,
        out_shape=jax.ShapeDtypeStruct((N, Cout, Ho * Wo), x_nchw.dtype),
        grid_spec=pltpu.PrefetchScalarGridSpec(
            num_scalar_prefetch=0,
            grid=(N,),
            in_specs=[
                pl.BlockSpec((1, Cin, H * W), lambda n: (n, 0, 0)),
                pl.BlockSpec((4 * Cout, 9 * Cin), lambda n: (0, 0)),
                pl.BlockSpec((4 * Cout, 1), lambda n: (0, 0)),
                pl.BlockSpec(m_perm.shape, lambda n: (0, 0, 0)),
            ],
            out_specs=pl.BlockSpec((1, Cout, Ho * Wo), lambda n: (n, 0, 0)),
            scratch_shapes=[
                pltpu.VMEM((Cin, H * W + 2 * _PADL), jnp.float32),
                pltpu.VMEM((9 * Cin, H * W), jnp.float32),
            ],
        ),
        compiler_params=pltpu.CompilerParams(
            dimension_semantics=("parallel",)),   # v7x: the two TCs split the batch
    )(x_flat, w_fused, b_col, m_perm)

    return out_flat.reshape(N, Cout, Ho, Wo)                     # free (contiguous)


def reference(x_nchw, weight_t, bias):
    """Pure-JAX reference: XLA dilated conv equivalent of the transposed conv + relu."""
    w_oihw = jnp.transpose(weight_t[:, :, ::-1, ::-1], (1, 0, 2, 3))
    lo = K - 1 - PAD
    hi = K - 1 - PAD + OUT_PAD
    out = jax.lax.conv_general_dilated(
        x_nchw, w_oihw, window_strides=(1, 1),
        padding=[(lo, hi), (lo, hi)],
        lhs_dilation=(STRIDE, STRIDE), rhs_dilation=(1, 1),
        dimension_numbers=('NCHW', 'OIHW', 'NCHW'))
    out = out + bias.reshape(1, -1, 1, 1)
    return jnp.maximum(out, 0.0)


if __name__ == "__main__":
    key = jax.random.PRNGKey(0)
    kx, kw, kb = jax.random.split(key, 3)
    N, H, W = 2, 16, 16
    x = jax.random.normal(kx, (N, IN_CH, H, W), jnp.float32)

    # Deterministic parameter init (uniform in +/- 1/sqrt(fan_in), same spirit as PyTorch).
    fan_in = OUT_CH * K * K
    bound = 1.0 / np.sqrt(fan_in)
    weight_t = jax.random.uniform(kw, (IN_CH, OUT_CH, K, K), jnp.float32, -bound, bound)
    bias = jax.random.uniform(kb, (OUT_CH,), jnp.float32, -bound, bound)

    out = jax.block_until_ready(transposed_conv_layer(x, weight_t, bias))
    ref = jax.block_until_ready(reference(x, weight_t, bias))
    assert out.shape == (N, OUT_CH, 2 * H, 2 * W), out.shape
    np.testing.assert_allclose(np.asarray(out), np.asarray(ref), rtol=1e-5, atol=1e-5)
    print("KERNEL_OK")
</pallas_src>

<mosaic_0001>
module attributes {stable_mosaic.version = 11 : i64} {
  func.func @kernel(%arg0: i32, %arg1: memref<1x4x256xf32, #tpu.memory_space<vmem>>, %arg2: memref<32x36xf32, #tpu.memory_space<vmem>>, %arg3: memref<32x1xf32, #tpu.memory_space<vmem>>, %arg4: memref<4x32x128xf32, #tpu.memory_space<vmem>>, %arg5: memref<1x8x1024xf32, #tpu.memory_space<vmem>>, %arg6: memref<4x512xf32, #tpu.memory_space<vmem>>, %arg7: memref<36x256xf32, #tpu.memory_space<vmem>>) attributes {dimension_semantics = [#tpu.dimension_semantics<parallel>], iteration_bounds = array<i64: 2>, scalar_prefetch = 0 : i64, scratch_operands = 2 : i64, tpu.core_type = #tpu.core_type<tc>, window_params = [{transform_indices = @transform_0, window_bounds = array<i64: 1, 4, 256>}, {pipeline_mode = #tpu.pipeline_mode<synchronous>, transform_indices = @transform_1, window_bounds = array<i64: 32, 36>}, {pipeline_mode = #tpu.pipeline_mode<synchronous>, transform_indices = @transform_2, window_bounds = array<i64: 32, 1>}, {pipeline_mode = #tpu.pipeline_mode<synchronous>, transform_indices = @transform_3, window_bounds = array<i64: 4, 32, 128>}, {transform_indices = @transform_4, window_bounds = array<i64: 1, 8, 1024>}]} {
    %cst = arith.constant 0.000000e+00 : f32
    %0 = vector.broadcast %cst : f32 to vector<4x128xf32>
    %c0 = arith.constant 0 : index
    %c0_0 = arith.constant 0 : index
    %1 = vector.load %arg6[%c0, %c0_0] : memref<4x512xf32, #tpu.memory_space<vmem>>, vector<4x128xf32>
    tpu.vector_store %arg6[%c0, %c0_0], %0 {strides = array<i32>} : memref<4x512xf32, #tpu.memory_space<vmem>>, vector<4x128xf32>,
    %cst_1 = arith.constant 0.000000e+00 : f32
    %2 = vector.broadcast %cst_1 : f32 to vector<4x128xf32>
    %c0_2 = arith.constant 0 : index
    %c384 = arith.constant 384 : index
    %3 = vector.load %arg6[%c0_2, %c384] : memref<4x512xf32, #tpu.memory_space<vmem>>, vector<4x128xf32>
    tpu.vector_store %arg6[%c0_2, %c384], %2 {strides = array<i32>} : memref<4x512xf32, #tpu.memory_space<vmem>>, vector<4x128xf32>,
    %c0_3 = arith.constant 0 : index
    %c0_4 = arith.constant 0 : index
    %c0_5 = arith.constant 0 : index
    %4 = vector.load %arg1[%c0_3, %c0_4, %c0_5] : memref<1x4x256xf32, #tpu.memory_space<vmem>>, vector<1x4x256xf32>
    %5 = vector.shape_cast %4 : vector<1x4x256xf32> to vector<4x256xf32>
    %c0_6 = arith.constant 0 : index
    %c128 = arith.constant 128 : index
    %6 = vector.load %arg6[%c0_6, %c128] : memref<4x512xf32, #tpu.memory_space<vmem>>, vector<4x256xf32>
    tpu.vector_store %arg6[%c0_6, %c128], %5 {strides = array<i32>} : memref<4x512xf32, #tpu.memory_space<vmem>>, vector<4x256xf32>,
    %c0_7 = arith.constant 0 : index
    %c0_8 = arith.constant 0 : index
    %7 = vector.load %arg6[%c0_7, %c0_8] : memref<4x512xf32, #tpu.memory_space<vmem>>, vector<4x512xf32>
    %8 = tpu.iota {dimensions = array<i32: 1>} : vector<1x256xi32>
    %c16_i32 = arith.constant 16 : i32
    %c0_i32 = arith.constant 0 : i32
    %9 = arith.cmpi eq, %c16_i32, %c0_i32 : i32
    %c1_i32 = arith.constant 1 : i32
    %10 = arith.select %9, %c1_i32, %c16_i32 : i32
    %11 = vector.broadcast %10 : i32 to vector<1x256xi32>
    %12 = arith.remsi %8, %11 : vector<1x256xi32>
    %c0_i32_9 = arith.constant 0 : i32
    %13 = vector.broadcast %c0_i32_9 : i32 to vector<1x256xi32>
    %14 = arith.cmpi ne, %12, %13 : vector<1x256xi32>
    %c0_i32_10 = arith.constant 0 : i32
    %15 = vector.broadcast %c0_i32_10 : i32 to vector<1x256xi32>
    %16 = arith.cmpi slt, %12, %15 : vector<1x256xi32>
    %c0_i32_11 = arith.constant 0 : i32
    %17 = arith.cmpi slt, %10, %c0_i32_11 : i32
    %18 = vector.broadcast %17 : i1 to vector<1x256xi1>
    %19 = vector.broadcast %18 : vector<1x256xi1> to vector<1x256xi1>
    %20 = arith.xori %16, %19 : vector<1x256xi1>
    %21 = arith.andi %20, %14 : vector<1x256xi1>
    %22 = vector.broadcast %10 : i32 to vector<1x256xi32>
    %23 = arith.addi %12, %22 : vector<1x256xi32>
    %24 = arith.select %21, %23, %12 : vector<1x256xi1>, vector<1x256xi32>
    %c15_i32 = arith.constant 15 : i32
    %25 = vector.broadcast %c15_i32 : i32 to vector<1x256xi32>
    %26 = arith.cmpi ne, %24, %25 : vector<1x256xi32>
    %27 = arith.extui %26 : vector<1x256xi1> to vector<1x256xi32>
    %28 = arith.sitofp %27 : vector<1x256xi32> to vector<1x256xf32>
    %c0_i32_12 = arith.constant 0 : i32
    %29 = vector.broadcast %c0_i32_12 : i32 to vector<1x256xi32>
    %30 = arith.cmpi ne, %24, %29 : vector<1x256xi32>
    %31 = arith.extui %30 : vector<1x256xi1> to vector<1x256xi32>
    %32 = arith.sitofp %31 : vector<1x256xi32> to vector<1x256xf32>
    %33 = vector.extract_strided_slice %7 {offsets = [0, 145], sizes = [4, 256], strides = [1, 1]} : vector<4x512xf32> to vector<4x256xf32>
    %34 = vector.broadcast %28 : vector<1x256xf32> to vector<4x256xf32>
    %35 = arith.mulf %33, %34 : vector<4x256xf32>
    %c0_13 = arith.constant 0 : index
    %c0_14 = arith.constant 0 : index
    %36 = vector.load %arg7[%c0_13, %c0_14] : memref<36x256xf32, #tpu.memory_space<vmem>>, vector<4x256xf32>
    tpu.vector_store %arg7[%c0_13, %c0_14], %35 {strides = array<i32>} : memref<36x256xf32, #tpu.memory_space<vmem>>, vector<4x256xf32>,
    %37 = vector.extract_strided_slice %7 {offsets = [0, 144], sizes = [4, 256], strides = [1, 1]} : vector<4x512xf32> to vector<4x256xf32>
    %c4 = arith.constant 4 : index
    %c0_15 = arith.constant 0 : index
    %38 = vector.load %arg7[%c4, %c0_15] : memref<36x256xf32, #tpu.memory_space<vmem>>, vector<4x256xf32>
    tpu.vector_store %arg7[%c4, %c0_15], %37 {strides = array<i32>} : memref<36x256xf32, #tpu.memory_space<vmem>>, vector<4x256xf32>,
    %39 = vector.extract_strided_slice %7 {offsets = [0, 143], sizes = [4, 256], strides = [1, 1]} : vector<4x512xf32> to vector<4x256xf32>
    %40 = vector.broadcast %32 : vector<1x256xf32> to vector<4x256xf32>
    %41 = arith.mulf %39, %40 : vector<4x256xf32>
    %c8 = arith.constant 8 : index
    %c0_16 = arith.constant 0 : index
    %42 = vector.load %arg7[%c8, %c0_16] : memref<36x256xf32, #tpu.memory_space<vmem>>, vector<4x256xf32>
    tpu.vector_store %arg7[%c8, %c0_16], %41 {strides = array<i32>} : memref<36x256xf32, #tpu.memory_space<vmem>>, vector<4x256xf32>,
    %43 = vector.extract_strided_slice %7 {offsets = [0, 129], sizes = [4, 256], strides = [1, 1]} : vector<4x512xf32> to vector<4x256xf32>
    %44 = vector.broadcast %28 : vector<1x256xf32> to vector<4x256xf32>
    %45 = arith.mulf %43, %44 : vector<4x256xf32>
    %c12 = arith.constant 12 : index
    %c0_17 = arith.constant 0 : index
    %46 = vector.load %arg7[%c12, %c0_17] : memref<36x256xf32, #tpu.memory_space<vmem>>, vector<4x256xf32>
    tpu.vector_store %arg7[%c12, %c0_17], %45 {strides = array<i32>} : memref<36x256xf32, #tpu.memory_space<vmem>>, vector<4x256xf32>,
    %47 = vector.extract_strided_slice %7 {offsets = [0, 128], sizes = [4, 256], strides = [1, 1]} : vector<4x512xf32> to vector<4x256xf32>
    %c16 = arith.constant 16 : index
    %c0_18 = arith.constant 0 : index
    %48 = vector.load %arg7[%c16, %c0_18] : memref<36x256xf32, #tpu.memory_space<vmem>>, vector<4x256xf32>
    tpu.vector_store %arg7[%c16, %c0_18], %47 {strides = array<i32>} : memref<36x256xf32, #tpu.memory_space<vmem>>, vector<4x256xf32>,
    %49 = vector.extract_strided_slice %7 {offsets = [0, 127], sizes = [4, 256], strides = [1, 1]} : vector<4x512xf32> to vector<4x256xf32>
    %50 = vector.broadcast %32 : vector<1x256xf32> to vector<4x256xf32>
    %51 = arith.mulf %49, %50 : vector<4x256xf32>
    %c20 = arith.constant 20 : index
    %c0_19 = arith.constant 0 : index
    %52 = vector.load %arg7[%c20, %c0_19] : memref<36x256xf32, #tpu.memory_space<vmem>>, vector<4x256xf32>
    tpu.vector_store %arg7[%c20, %c0_19], %51 {strides = array<i32>} : memref<36x256xf32, #tpu.memory_space<vmem>>, vector<4x256xf32>,
    %53 = vector.extract_strided_slice %7 {offsets = [0, 113], sizes = [4, 256], strides = [1, 1]} : vector<4x512xf32> to vector<4x256xf32>
    %54 = vector.broadcast %28 : vector<1x256xf32> to vector<4x256xf32>
    %55 = arith.mulf %53, %54 : vector<4x256xf32>
    %c24 = arith.constant 24 : index
    %c0_20 = arith.constant 0 : index
    %56 = vector.load %arg7[%c24, %c0_20] : memref<36x256xf32, #tpu.memory_space<vmem>>, vector<4x256xf32>
    tpu.vector_store %arg7[%c24, %c0_20], %55 {strides = array<i32>} : memref<36x256xf32, #tpu.memory_space<vmem>>, vector<4x256xf32>,
    %57 = vector.extract_strided_slice %7 {offsets = [0, 112], sizes = [4, 256], strides = [1, 1]} : vector<4x512xf32> to vector<4x256xf32>
    %c28 = arith.constant 28 : index
    %c0_21 = arith.constant 0 : index
    %58 = vector.load %arg7[%c28, %c0_21] : memref<36x256xf32, #tpu.memory_space<vmem>>, vector<4x256xf32>
    tpu.vector_store %arg7[%c28, %c0_21], %57 {strides = array<i32>} : memref<36x256xf32, #tpu.memory_space<vmem>>, vector<4x256xf32>,
    %59 = vector.extract_strided_slice %7 {offsets = [0, 111], sizes = [4, 256], strides = [1, 1]} : vector<4x512xf32> to vector<4x256xf32>
    %60 = vector.broadcast %32 : vector<1x256xf32> to vector<4x256xf32>
    %61 = arith.mulf %59, %60 : vector<4x256xf32>
    %c32 = arith.constant 32 : index
    %c0_22 = arith.constant 0 : index
    %62 = vector.load %arg7[%c32, %c0_22] : memref<36x256xf32, #tpu.memory_space<vmem>>, vector<4x256xf32>
    tpu.vector_store %arg7[%c32, %c0_22], %61 {strides = array<i32>} : memref<36x256xf32, #tpu.memory_space<vmem>>, vector<4x256xf32>,
    %c0_23 = arith.constant 0 : index
    %c0_24 = arith.constant 0 : index
    %63 = vector.load %arg2[%c0_23, %c0_24] : memref<32x36xf32, #tpu.memory_space<vmem>>, vector<32x36xf32>
    %c0_25 = arith.constant 0 : index
    %c0_26 = arith.constant 0 : index
    %64 = vector.load %arg7[%c0_25, %c0_26] : memref<36x256xf32, #tpu.memory_space<vmem>>, vector<36x256xf32>
    %cst_27 = arith.constant dense<0.000000e+00> : vector<32x256xf32>
    %65 = tpu.matmul %63, %64, %cst_27 {dimension_numbers = #tpu.dot_dimension_numbers<[1], [0], [0], [1], [0, 0, 1, 1], [], []>} : vector<32x36xf32>, vector<36x256xf32>, vector<32x256xf32> -> vector<32x256xf32>
    %c0_28 = arith.constant 0 : index
    %c0_29 = arith.constant 0 : index
    %66 = vector.load %arg3[%c0_28, %c0_29] : memref<32x1xf32, #tpu.memory_space<vmem>>, vector<32x1xf32>
    %67 = vector.broadcast %66 : vector<32x1xf32> to vector<32x256xf32>
    %68 = arith.addf %65, %67 : vector<32x256xf32>
    %cst_30 = arith.constant 0.000000e+00 : f32
    %69 = vector.broadcast %cst_30 : f32 to vector<32x256xf32>
    %70 = arith.maximumf %68, %69 : vector<32x256xf32>
    %c0_31 = arith.constant 0 : index
    %c0_32 = arith.constant 0 : index
    %c0_33 = arith.constant 0 : index
    %71 = vector.load %arg4[%c0_31, %c0_32, %c0_33] : memref<4x32x128xf32, #tpu.memory_space<vmem>>, vector<1x32x128xf32>
    %72 = vector.shape_cast %71 : vector<1x32x128xf32> to vector<32x128xf32>
    %c1 = arith.constant 1 : index
    %c0_34 = arith.constant 0 : index
    %c0_35 = arith.constant 0 : index
    %73 = vector.load %arg4[%c1, %c0_34, %c0_35] : memref<4x32x128xf32, #tpu.memory_space<vmem>>, vector<1x32x128xf32>
    %74 = vector.shape_cast %73 : vector<1x32x128xf32> to vector<32x128xf32>
    %c2 = arith.constant 2 : index
    %c0_36 = arith.constant 0 : index
    %c0_37 = arith.constant 0 : index
    %75 = vector.load %arg4[%c2, %c0_36, %c0_37] : memref<4x32x128xf32, #tpu.memory_space<vmem>>, vector<1x32x128xf32>
    %76 = vector.shape_cast %75 : vector<1x32x128xf32> to vector<32x128xf32>
    %c3 = arith.constant 3 : index
    %c0_38 = arith.constant 0 : index
    %c0_39 = arith.constant 0 : index
    %77 = vector.load %arg4[%c3, %c0_38, %c0_39] : memref<4x32x128xf32, #tpu.memory_space<vmem>>, vector<1x32x128xf32>
    %78 = vector.shape_cast %77 : vector<1x32x128xf32> to vector<32x128xf32>
    %79 = vector.extract_strided_slice %70 {offsets = [0, 0], sizes = [32, 32], strides = [1, 1]} : vector<32x256xf32> to vector<32x32xf32>
    %80 = vector.extract_strided_slice %79 {offsets = [0, 0], sizes = [8, 32], strides = [1, 1]} : vector<32x32xf32> to vector<8x32xf32>
    %cst_40 = arith.constant dense<0.000000e+00> : vector<8x128xf32>
    %81 = tpu.matmul %80, %72, %cst_40 {dimension_numbers = #tpu.dot_dimension_numbers<[1], [0], [0], [1], [0, 0, 1, 1], [], []>} : vector<8x32xf32>, vector<32x128xf32>, vector<8x128xf32> -> vector<8x128xf32>
    %82 = vector.extract_strided_slice %79 {offsets = [8, 0], sizes = [8, 32], strides = [1, 1]} : vector<32x32xf32> to vector<8x32xf32>
    %cst_41 = arith.constant dense<0.000000e+00> : vector<8x128xf32>
    %83 = tpu.matmul %82, %74, %cst_41 {dimension_numbers = #tpu.dot_dimension_numbers<[1], [0], [0], [1], [0, 0, 1, 1], [], []>} : vector<8x32xf32>, vector<32x128xf32>, vector<8x128xf32> -> vector<8x128xf32>
    %84 = arith.addf %81, %83 : vector<8x128xf32>
    %85 = vector.extract_strided_slice %79 {offsets = [16, 0], sizes = [8, 32], strides = [1, 1]} : vector<32x32xf32> to vector<8x32xf32>
    %cst_42 = arith.constant dense<0.000000e+00> : vector<8x128xf32>
    %86 = tpu.matmul %85, %76, %cst_42 {dimension_numbers = #tpu.dot_dimension_numbers<[1], [0], [0], [1], [0, 0, 1, 1], [], []>} : vector<8x32xf32>, vector<32x128xf32>, vector<8x128xf32> -> vector<8x128xf32>
    %87 = arith.addf %84, %86 : vector<8x128xf32>
    %88 = vector.extract_strided_slice %79 {offsets = [24, 0], sizes = [8, 32], strides = [1, 1]} : vector<32x32xf32> to vector<8x32xf32>
    %cst_43 = arith.constant dense<0.000000e+00> : vector<8x128xf32>
    %89 = tpu.matmul %88, %78, %cst_43 {dimension_numbers = #tpu.dot_dimension_numbers<[1], [0], [0], [1], [0, 0, 1, 1], [], []>} : vector<8x32xf32>, vector<32x128xf32>, vector<8x128xf32> -> vector<8x128xf32>
    %90 = arith.addf %87, %89 : vector<8x128xf32>
    %c0_44 = arith.constant 0 : index
    %c0_45 = arith.constant 0 : index
    %c0_46 = arith.constant 0 : index
    %91 = vector.load %arg5[%c0_44, %c0_45, %c0_46] : memref<1x8x1024xf32, #tpu.memory_space<vmem>>, vector<1x8x128xf32>
    %92 = vector.shape_cast %91 : vector<1x8x128xf32> to vector<8x128xf32>
    %93 = vector.shape_cast %90 : vector<8x128xf32> to vector<1x8x128xf32>
    tpu.vector_store %arg5[%c0_44, %c0_45, %c0_46], %93 {strides = array<i32>} : memref<1x8x1024xf32, #tpu.memory_space<vmem>>, vector<1x8x128xf32>,
    %94 = vector.extract_strided_slice %70 {offsets = [0, 32], sizes = [32, 32], strides = [1, 1]} : vector<32x256xf32> to vector<32x32xf32>
    %95 = vector.extract_strided_slice %94 {offsets = [0, 0], sizes = [8, 32], strides = [1, 1]} : vector<32x32xf32> to vector<8x32xf32>
    %cst_47 = arith.constant dense<0.000000e+00> : vector<8x128xf32>
    %96 = tpu.matmul %95, %72, %cst_47 {dimension_numbers = #tpu.dot_dimension_numbers<[1], [0], [0], [1], [0, 0, 1, 1], [], []>} : vector<8x32xf32>, vector<32x128xf32>, vector<8x128xf32> -> vector<8x128xf32>
    %97 = vector.extract_strided_slice %94 {offsets = [8, 0], sizes = [8, 32], strides = [1, 1]} : vector<32x32xf32> to vector<8x32xf32>
    %cst_48 = arith.constant dense<0.000000e+00> : vector<8x128xf32>
    %98 = tpu.matmul %97, %74, %cst_48 {dimension_numbers = #tpu.dot_dimension_numbers<[1], [0], [0], [1], [0, 0, 1, 1], [], []>} : vector<8x32xf32>, vector<32x128xf32>, vector<8x128xf32> -> vector<8x128xf32>
    %99 = arith.addf %96, %98 : vector<8x128xf32>
    %100 = vector.extract_strided_slice %94 {offsets = [16, 0], sizes = [8, 32], strides = [1, 1]} : vector<32x32xf32> to vector<8x32xf32>
    %cst_49 = arith.constant dense<0.000000e+00> : vector<8x128xf32>
    %101 = tpu.matmul %100, %76, %cst_49 {dimension_numbers = #tpu.dot_dimension_numbers<[1], [0], [0], [1], [0, 0, 1, 1], [], []>} : vector<8x32xf32>, vector<32x128xf32>, vector<8x128xf32> -> vector<8x128xf32>
    %102 = arith.addf %99, %101 : vector<8x128xf32>
    %103 = vector.extract_strided_slice %94 {offsets = [24, 0], sizes = [8, 32], strides = [1, 1]} : vector<32x32xf32> to vector<8x32xf32>
    %cst_50 = arith.constant dense<0.000000e+00> : vector<8x128xf32>
    %104 = tpu.matmul %103, %78, %cst_50 {dimension_numbers = #tpu.dot_dimension_numbers<[1], [0], [0], [1], [0, 0, 1, 1], [], []>} : vector<8x32xf32>, vector<32x128xf32>, vector<8x128xf32> -> vector<8x128xf32>
    %105 = arith.addf %102, %104 : vector<8x128xf32>
    %c0_51 = arith.constant 0 : index
    %c0_52 = arith.constant 0 : index
    %c128_53 = arith.constant 128 : index
    %106 = vector.load %arg5[%c0_51, %c0_52, %c128_53] : memref<1x8x1024xf32, #tpu.memory_space<vmem>>, vector<1x8x128xf32>
    %107 = vector.shape_cast %106 : vector<1x8x128xf32> to vector<8x128xf32>
    %108 = vector.shape_cast %105 : vector<8x128xf32> to vector<1x8x128xf32>
    tpu.vector_store %arg5[%c0_51, %c0_52, %c128_53], %108 {strides = array<i32>} : memref<1x8x1024xf32, #tpu.memory_space<vmem>>, vector<1x8x128xf32>,
    %109 = vector.extract_strided_slice %70 {offsets = [0, 64], sizes = [32, 32], strides = [1, 1]} : vector<32x256xf32> to vector<32x32xf32>
    %110 = vector.extract_strided_slice %109 {offsets = [0, 0], sizes = [8, 32], strides = [1, 1]} : vector<32x32xf32> to vector<8x32xf32>
    %cst_54 = arith.constant dense<0.000000e+00> : vector<8x128xf32>
    %111 = tpu.matmul %110, %72, %cst_54 {dimension_numbers = #tpu.dot_dimension_numbers<[1], [0], [0], [1], [0, 0, 1, 1], [], []>} : vector<8x32xf32>, vector<32x128xf32>, vector<8x128xf32> -> vector<8x128xf32>
    %112 = vector.extract_strided_slice %109 {offsets = [8, 0], sizes = [8, 32], strides = [1, 1]} : vector<32x32xf32> to vector<8x32xf32>
    %cst_55 = arith.constant dense<0.000000e+00> : vector<8x128xf32>
    %113 = tpu.matmul %112, %74, %cst_55 {dimension_numbers = #tpu.dot_dimension_numbers<[1], [0], [0], [1], [0, 0, 1, 1], [], []>} : vector<8x32xf32>, vector<32x128xf32>, vector<8x128xf32> -> vector<8x128xf32>
    %114 = arith.addf %111, %113 : vector<8x128xf32>
    %115 = vector.extract_strided_slice %109 {offsets = [16, 0], sizes = [8, 32], strides = [1, 1]} : vector<32x32xf32> to vector<8x32xf32>
    %cst_56 = arith.constant dense<0.000000e+00> : vector<8x128xf32>
    %116 = tpu.matmul %115, %76, %cst_56 {dimension_numbers = #tpu.dot_dimension_numbers<[1], [0], [0], [1], [0, 0, 1, 1], [], []>} : vector<8x32xf32>, vector<32x128xf32>, vector<8x128xf32> -> vector<8x128xf32>
    %117 = arith.addf %114, %116 : vector<8x128xf32>
    %118 = vector.extract_strided_slice %109 {offsets = [24, 0], sizes = [8, 32], strides = [1, 1]} : vector<32x32xf32> to vector<8x32xf32>
    %cst_57 = arith.constant dense<0.000000e+00> : vector<8x128xf32>
    %119 = tpu.matmul %118, %78, %cst_57 {dimension_numbers = #tpu.dot_dimension_numbers<[1], [0], [0], [1], [0, 0, 1, 1], [], []>} : vector<8x32xf32>, vector<32x128xf32>, vector<8x128xf32> -> vector<8x128xf32>
    %120 = arith.addf %117, %119 : vector<8x128xf32>
    %c0_58 = arith.constant 0 : index
    %c0_59 = arith.constant 0 : index
    %c256 = arith.constant 256 : index
    %121 = vector.load %arg5[%c0_58, %c0_59, %c256] : memref<1x8x1024xf32, #tpu.memory_space<vmem>>, vector<1x8x128xf32>
    %122 = vector.shape_cast %121 : vector<1x8x128xf32> to vector<8x128xf32>
    %123 = vector.shape_cast %120 : vector<8x128xf32> to vector<1x8x128xf32>
    tpu.vector_store %arg5[%c0_58, %c0_59, %c256], %123 {strides = array<i32>} : memref<1x8x1024xf32, #tpu.memory_space<vmem>>, vector<1x8x128xf32>,
    %124 = vector.extract_strided_slice %70 {offsets = [0, 96], sizes = [32, 32], strides = [1, 1]} : vector<32x256xf32> to vector<32x32xf32>
    %125 = vector.extract_strided_slice %124 {offsets = [0, 0], sizes = [8, 32], strides = [1, 1]} : vector<32x32xf32> to vector<8x32xf32>
    %cst_60 = arith.constant dense<0.000000e+00> : vector<8x128xf32>
    %126 = tpu.matmul %125, %72, %cst_60 {dimension_numbers = #tpu.dot_dimension_numbers<[1], [0], [0], [1], [0, 0, 1, 1], [], []>} : vector<8x32xf32>, vector<32x128xf32>, vector<8x128xf32> -> vector<8x128xf32>
    %127 = vector.extract_strided_slice %124 {offsets = [8, 0], sizes = [8, 32], strides = [1, 1]} : vector<32x32xf32> to vector<8x32xf32>
    %cst_61 = arith.constant dense<0.000000e+00> : vector<8x128xf32>
    %128 = tpu.matmul %127, %74, %cst_61 {dimension_numbers = #tpu.dot_dimension_numbers<[1], [0], [0], [1], [0, 0, 1, 1], [], []>} : vector<8x32xf32>, vector<32x128xf32>, vector<8x128xf32> -> vector<8x128xf32>
    %129 = arith.addf %126, %128 : vector<8x128xf32>
    %130 = vector.extract_strided_slice %124 {offsets = [16, 0], sizes = [8, 32], strides = [1, 1]} : vector<32x32xf32> to vector<8x32xf32>
    %cst_62 = arith.constant dense<0.000000e+00> : vector<8x128xf32>
    %131 = tpu.matmul %130, %76, %cst_62 {dimension_numbers = #tpu.dot_dimension_numbers<[1], [0], [0], [1], [0, 0, 1, 1], [], []>} : vector<8x32xf32>, vector<32x128xf32>, vector<8x128xf32> -> vector<8x128xf32>
    %132 = arith.addf %129, %131 : vector<8x128xf32>
    %133 = vector.extract_strided_slice %124 {offsets = [24, 0], sizes = [8, 32], strides = [1, 1]} : vector<32x32xf32> to vector<8x32xf32>
    %cst_63 = arith.constant dense<0.000000e+00> : vector<8x128xf32>
    %134 = tpu.matmul %133, %78, %cst_63 {dimension_numbers = #tpu.dot_dimension_numbers<[1], [0], [0], [1], [0, 0, 1, 1], [], []>} : vector<8x32xf32>, vector<32x128xf32>, vector<8x128xf32> -> vector<8x128xf32>
    %135 = arith.addf %132, %134 : vector<8x128xf32>
    %c0_64 = arith.constant 0 : index
    %c0_65 = arith.constant 0 : index
    %c384_66 = arith.constant 384 : index
    %136 = vector.load %arg5[%c0_64, %c0_65, %c384_66] : memref<1x8x1024xf32, #tpu.memory_space<vmem>>, vector<1x8x128xf32>
    %137 = vector.shape_cast %136 : vector<1x8x128xf32> to vector<8x128xf32>
    %138 = vector.shape_cast %135 : vector<8x128xf32> to vector<1x8x128xf32>
    tpu.vector_store %arg5[%c0_64, %c0_65, %c384_66], %138 {strides = array<i32>} : memref<1x8x1024xf32, #tpu.memory_space<vmem>>, vector<1x8x128xf32>,
    %139 = vector.extract_strided_slice %70 {offsets = [0, 128], sizes = [32, 32], strides = [1, 1]} : vector<32x256xf32> to vector<32x32xf32>
    %140 = vector.extract_strided_slice %139 {offsets = [0, 0], sizes = [8, 32], strides = [1, 1]} : vector<32x32xf32> to vector<8x32xf32>
    %cst_67 = arith.constant dense<0.000000e+00> : vector<8x128xf32>
    %141 = tpu.matmul %140, %72, %cst_67 {dimension_numbers = #tpu.dot_dimension_numbers<[1], [0], [0], [1], [0, 0, 1, 1], [], []>} : vector<8x32xf32>, vector<32x128xf32>, vector<8x128xf32> -> vector<8x128xf32>
    %142 = vector.extract_strided_slice %139 {offsets = [8, 0], sizes = [8, 32], strides = [1, 1]} : vector<32x32xf32> to vector<8x32xf32>
    %cst_68 = arith.constant dense<0.000000e+00> : vector<8x128xf32>
    %143 = tpu.matmul %142, %74, %cst_68 {dimension_numbers = #tpu.dot_dimension_numbers<[1], [0], [0], [1], [0, 0, 1, 1], [], []>} : vector<8x32xf32>, vector<32x128xf32>, vector<8x128xf32> -> vector<8x128xf32>
    %144 = arith.addf %141, %143 : vector<8x128xf32>
    %145 = vector.extract_strided_slice %139 {offsets = [16, 0], sizes = [8, 32], strides = [1, 1]} : vector<32x32xf32> to vector<8x32xf32>
    %cst_69 = arith.constant dense<0.000000e+00> : vector<8x128xf32>
    %146 = tpu.matmul %145, %76, %cst_69 {dimension_numbers = #tpu.dot_dimension_numbers<[1], [0], [0], [1], [0, 0, 1, 1], [], []>} : vector<8x32xf32>, vector<32x128xf32>, vector<8x128xf32> -> vector<8x128xf32>
    %147 = arith.addf %144, %146 : vector<8x128xf32>
    %148 = vector.extract_strided_slice %139 {offsets = [24, 0], sizes = [8, 32], strides = [1, 1]} : vector<32x32xf32> to vector<8x32xf32>
    %cst_70 = arith.constant dense<0.000000e+00> : vector<8x128xf32>
    %149 = tpu.matmul %148, %78, %cst_70 {dimension_numbers = #tpu.dot_dimension_numbers<[1], [0], [0], [1], [0, 0, 1, 1], [], []>} : vector<8x32xf32>, vector<32x128xf32>, vector<8x128xf32> -> vector<8x128xf32>
    %150 = arith.addf %147, %149 : vector<8x128xf32>
    %c0_71 = arith.constant 0 : index
    %c0_72 = arith.constant 0 : index
    %c512 = arith.constant 512 : index
    %151 = vector.load %arg5[%c0_71, %c0_72, %c512] : memref<1x8x1024xf32, #tpu.memory_space<vmem>>, vector<1x8x128xf32>
    %152 = vector.shape_cast %151 : vector<1x8x128xf32> to vector<8x128xf32>
    %153 = vector.shape_cast %150 : vector<8x128xf32> to vector<1x8x128xf32>
    tpu.vector_store %arg5[%c0_71, %c0_72, %c512], %153 {strides = array<i32>} : memref<1x8x1024xf32, #tpu.memory_space<vmem>>, vector<1x8x128xf32>,
    %154 = vector.extract_strided_slice %70 {offsets = [0, 160], sizes = [32, 32], strides = [1, 1]} : vector<32x256xf32> to vector<32x32xf32>
    %155 = vector.extract_strided_slice %154 {offsets = [0, 0], sizes = [8, 32], strides = [1, 1]} : vector<32x32xf32> to vector<8x32xf32>
    %cst_73 = arith.constant dense<0.000000e+00> : vector<8x128xf32>
    %156 = tpu.matmul %155, %72, %cst_73 {dimension_numbers = #tpu.dot_dimension_numbers<[1], [0], [0], [1], [0, 0, 1, 1], [], []>} : vector<8x32xf32>, vector<32x128xf32>, vector<8x128xf32> -> vector<8x128xf32>
    %157 = vector.extract_strided_slice %154 {offsets = [8, 0], sizes = [8, 32], strides = [1, 1]} : vector<32x32xf32> to vector<8x32xf32>
    %cst_74 = arith.constant dense<0.000000e+00> : vector<8x128xf32>
    %158 = tpu.matmul %157, %74, %cst_74 {dimension_numbers = #tpu.dot_dimension_numbers<[1], [0], [0], [1], [0, 0, 1, 1], [], []>} : vector<8x32xf32>, vector<32x128xf32>, vector<8x128xf32> -> vector<8x128xf32>
    %159 = arith.addf %156, %158 : vector<8x128xf32>
    %160 = vector.extract_strided_slice %154 {offsets = [16, 0], sizes = [8, 32], strides = [1, 1]} : vector<32x32xf32> to vector<8x32xf32>
    %cst_75 = arith.constant dense<0.000000e+00> : vector<8x128xf32>
    %161 = tpu.matmul %160, %76, %cst_75 {dimension_numbers = #tpu.dot_dimension_numbers<[1], [0], [0], [1], [0, 0, 1, 1], [], []>} : vector<8x32xf32>, vector<32x128xf32>, vector<8x128xf32> -> vector<8x128xf32>
    %162 = arith.addf %159, %161 : vector<8x128xf32>
    %163 = vector.extract_strided_slice %154 {offsets = [24, 0], sizes = [8, 32], strides = [1, 1]} : vector<32x32xf32> to vector<8x32xf32>
    %cst_76 = arith.constant dense<0.000000e+00> : vector<8x128xf32>
    %164 = tpu.matmul %163, %78, %cst_76 {dimension_numbers = #tpu.dot_dimension_numbers<[1], [0], [0], [1], [0, 0, 1, 1], [], []>} : vector<8x32xf32>, vector<32x128xf32>, vector<8x128xf32> -> vector<8x128xf32>
    %165 = arith.addf %162, %164 : vector<8x128xf32>
    %c0_77 = arith.constant 0 : index
    %c0_78 = arith.constant 0 : index
    %c640 = arith.constant 640 : index
    %166 = vector.load %arg5[%c0_77, %c0_78, %c640] : memref<1x8x1024xf32, #tpu.memory_space<vmem>>, vector<1x8x128xf32>
    %167 = vector.shape_cast %166 : vector<1x8x128xf32> to vector<8x128xf32>
    %168 = vector.shape_cast %165 : vector<8x128xf32> to vector<1x8x128xf32>
    tpu.vector_store %arg5[%c0_77, %c0_78, %c640], %168 {strides = array<i32>} : memref<1x8x1024xf32, #tpu.memory_space<vmem>>, vector<1x8x128xf32>,
    %169 = vector.extract_strided_slice %70 {offsets = [0, 192], sizes = [32, 32], strides = [1, 1]} : vector<32x256xf32> to vector<32x32xf32>
    %170 = vector.extract_strided_slice %169 {offsets = [0, 0], sizes = [8, 32], strides = [1, 1]} : vector<32x32xf32> to vector<8x32xf32>
    %cst_79 = arith.constant dense<0.000000e+00> : vector<8x128xf32>
    %171 = tpu.matmul %170, %72, %cst_79 {dimension_numbers = #tpu.dot_dimension_numbers<[1], [0], [0], [1], [0, 0, 1, 1], [], []>} : vector<8x32xf32>, vector<32x128xf32>, vector<8x128xf32> -> vector<8x128xf32>
    %172 = vector.extract_strided_slice %169 {offsets = [8, 0], sizes = [8, 32], strides = [1, 1]} : vector<32x32xf32> to vector<8x32xf32>
    %cst_80 = arith.constant dense<0.000000e+00> : vector<8x128xf32>
    %173 = tpu.matmul %172, %74, %cst_80 {dimension_numbers = #tpu.dot_dimension_numbers<[1], [0], [0], [1], [0, 0, 1, 1], [], []>} : vector<8x32xf32>, vector<32x128xf32>, vector<8x128xf32> -> vector<8x128xf32>
    %174 = arith.addf %171, %173 : vector<8x128xf32>
    %175 = vector.extract_strided_slice %169 {offsets = [16, 0], sizes = [8, 32], strides = [1, 1]} : vector<32x32xf32> to vector<8x32xf32>
    %cst_81 = arith.constant dense<0.000000e+00> : vector<8x128xf32>
    %176 = tpu.matmul %175, %76, %cst_81 {dimension_numbers = #tpu.dot_dimension_numbers<[1], [0], [0], [1], [0, 0, 1, 1], [], []>} : vector<8x32xf32>, vector<32x128xf32>, vector<8x128xf32> -> vector<8x128xf32>
    %177 = arith.addf %174, %176 : vector<8x128xf32>
    %178 = vector.extract_strided_slice %169 {offsets = [24, 0], sizes = [8, 32], strides = [1, 1]} : vector<32x32xf32> to vector<8x32xf32>
    %cst_82 = arith.constant dense<0.000000e+00> : vector<8x128xf32>
    %179 = tpu.matmul %178, %78, %cst_82 {dimension_numbers = #tpu.dot_dimension_numbers<[1], [0], [0], [1], [0, 0, 1, 1], [], []>} : vector<8x32xf32>, vector<32x128xf32>, vector<8x128xf32> -> vector<8x128xf32>
    %180 = arith.addf %177, %179 : vector<8x128xf32>
    %c0_83 = arith.constant 0 : index
    %c0_84 = arith.constant 0 : index
    %c768 = arith.constant 768 : index
    %181 = vector.load %arg5[%c0_83, %c0_84, %c768] : memref<1x8x1024xf32, #tpu.memory_space<vmem>>, vector<1x8x128xf32>
    %182 = vector.shape_cast %181 : vector<1x8x128xf32> to vector<8x128xf32>
    %183 = vector.shape_cast %180 : vector<8x128xf32> to vector<1x8x128xf32>
    tpu.vector_store %arg5[%c0_83, %c0_84, %c768], %183 {strides = array<i32>} : memref<1x8x1024xf32, #tpu.memory_space<vmem>>, vector<1x8x128xf32>,
    %184 = vector.extract_strided_slice %70 {offsets = [0, 224], sizes = [32, 32], strides = [1, 1]} : vector<32x256xf32> to vector<32x32xf32>
    %185 = vector.extract_strided_slice %184 {offsets = [0, 0], sizes = [8, 32], strides = [1, 1]} : vector<32x32xf32> to vector<8x32xf32>
    %cst_85 = arith.constant dense<0.000000e+00> : vector<8x128xf32>
    %186 = tpu.matmul %185, %72, %cst_85 {dimension_numbers = #tpu.dot_dimension_numbers<[1], [0], [0], [1], [0, 0, 1, 1], [], []>} : vector<8x32xf32>, vector<32x128xf32>, vector<8x128xf32> -> vector<8x128xf32>
    %187 = vector.extract_strided_slice %184 {offsets = [8, 0], sizes = [8, 32], strides = [1, 1]} : vector<32x32xf32> to vector<8x32xf32>
    %cst_86 = arith.constant dense<0.000000e+00> : vector<8x128xf32>
    %188 = tpu.matmul %187, %74, %cst_86 {dimension_numbers = #tpu.dot_dimension_numbers<[1], [0], [0], [1], [0, 0, 1, 1], [], []>} : vector<8x32xf32>, vector<32x128xf32>, vector<8x128xf32> -> vector<8x128xf32>
    %189 = arith.addf %186, %188 : vector<8x128xf32>
    %190 = vector.extract_strided_slice %184 {offsets = [16, 0], sizes = [8, 32], strides = [1, 1]} : vector<32x32xf32> to vector<8x32xf32>
    %cst_87 = arith.constant dense<0.000000e+00> : vector<8x128xf32>
    %191 = tpu.matmul %190, %76, %cst_87 {dimension_numbers = #tpu.dot_dimension_numbers<[1], [0], [0], [1], [0, 0, 1, 1], [], []>} : vector<8x32xf32>, vector<32x128xf32>, vector<8x128xf32> -> vector<8x128xf32>
    %192 = arith.addf %189, %191 : vector<8x128xf32>
    %193 = vector.extract_strided_slice %184 {offsets = [24, 0], sizes = [8, 32], strides = [1, 1]} : vector<32x32xf32> to vector<8x32xf32>
    %cst_88 = arith.constant dense<0.000000e+00> : vector<8x128xf32>
    %194 = tpu.matmul %193, %78, %cst_88 {dimension_numbers = #tpu.dot_dimension_numbers<[1], [0], [0], [1], [0, 0, 1, 1], [], []>} : vector<8x32xf32>, vector<32x128xf32>, vector<8x128xf32> -> vector<8x128xf32>
    %195 = arith.addf %192, %194 : vector<8x128xf32>
    %c0_89 = arith.constant 0 : index
    %c0_90 = arith.constant 0 : index
    %c896 = arith.constant 896 : index
    %196 = vector.load %arg5[%c0_89, %c0_90, %c896] : memref<1x8x1024xf32, #tpu.memory_space<vmem>>, vector<1x8x128xf32>
    %197 = vector.shape_cast %196 : vector<1x8x128xf32> to vector<8x128xf32>
    %198 = vector.shape_cast %195 : vector<8x128xf32> to vector<1x8x128xf32>
    tpu.vector_store %arg5[%c0_89, %c0_90, %c896], %198 {strides = array<i32>} : memref<1x8x1024xf32, #tpu.memory_space<vmem>>, vector<1x8x128xf32>,
    return
  }
  func.func @transform_0(%arg0: i32) -> (i32, i32, i32) {
    %c0_i32 = arith.constant 0 : i32
    %c0_i32_0 = arith.constant 0 : i32
    %c0_i32_1 = arith.constant 0 : i32
    return %arg0, %c0_i32, %c0_i32_0 : i32, i32, i32
  }
  func.func @transform_1(%arg0: i32) -> (i32, i32) {
    %c0_i32 = arith.constant 0 : i32
    %c0_i32_0 = arith.constant 0 : i32
    %c0_i32_1 = arith.constant 0 : i32
    return %c0_i32, %c0_i32_0 : i32, i32
  }
  func.func @transform_2(%arg0: i32) -> (i32, i32) {
    %c0_i32 = arith.constant 0 : i32
    %c0_i32_0 = arith.constant 0 : i32
    %c0_i32_1 = arith.constant 0 : i32
    return %c0_i32, %c0_i32_0 : i32, i32
  }
  func.func @transform_3(%arg0: i32) -> (i32, i32, i32) {
    %c0_i32 = arith.constant 0 : i32
    %c0_i32_0 = arith.constant 0 : i32
    %c0_i32_1 = arith.constant 0 : i32
    %c0_i32_2 = arith.constant 0 : i32
    return %c0_i32, %c0_i32_0, %c0_i32_1 : i32, i32, i32
  }
  func.func @transform_4(%arg0: i32) -> (i32, i32, i32) {
    %c0_i32 = arith.constant 0 : i32
    %c0_i32_0 = arith.constant 0 : i32
    %c0_i32_1 = arith.constant 0 : i32
    return %arg0, %c0_i32, %c0_i32_0 : i32, i32, i32
  }
}

</mosaic_0001>

<llo_original>
// kernel: tpu_custom_call.1
$region0: #{tpu_custom_call.1}
  #allocation0 [shape = 'u32[]', space=smem, size = 0x4, offset = 0x4, fixed_abs, tag = 'smem constant byte address 0x4 - core index']
  #allocation1 [shape = 'u32[72,128]{1,0:T(1,128)}', space=vmem, size = 0x9000, scoped, tag = 'internal scratch']
  #allocation2 [shape = 'f32[4,512]{1,0:T(4,128)}', space=vmem, size = 0x2000, scoped, tag = 'scratch operand']
  #allocation3 [shape = 'f32[36,256]{1,0:T(8,128)}', space=vmem, size = 0xa000, scoped, tag = 'scratch operand']
  %s0 = inlined_call_operand.hbm [shape: f32[2,4,256], index: 0, kind: input, shape index: {}]
  %s1 = inlined_call_operand.vmem [shape: f32[32,36], index: 1, kind: input, shape index: {}]
  %s2 = inlined_call_operand.vmem [shape: f32[32,1], index: 2, kind: input, shape index: {}]
  %s3 = inlined_call_operand.hbm [shape: f32[4,32,128], index: 3, kind: input, shape index: {}]
  %s4 = inlined_call_operand.hbm [shape: f32[2,8,1024], index: 4, kind: output, shape index: {}]
  %s5 = sld [smem:[#allocation0]]
  $region57: #{tpu_custom_call.1} parent=0
    _
  %s7 = ssub.s32 1, %s5
  %s8 = scalar_select 0, %s7, %s5
  $region1: #{tpu_custom_call.1} parent=0
    #allocation4 [shape = 'u8[8192]{0}', space=vmem, size = 0x2000, scoped, tag = 'input window, operand 0']
    #allocation5 [shape = 's32[2]{0}', space=sflag, size = 0x8, scoped, tag = 'scoped memory for tpu_custom_call.1']
    #allocation6 [shape = 's32[2]{0}', space=sflag, size = 0x8, scoped, tag = 'scoped memory for tpu_custom_call.1']
    #allocation7 [shape = 'u8[65536]{0}', space=vmem, size = 0x10000, scoped, tag = 'input window, operand 3, single buffered']
    #allocation8 [shape = 's32[1]{0}', space=sflag, size = 0x4, scoped, tag = 'scoped memory for tpu_custom_call.1']
    #allocation9 [shape = 'u8[65536]{0}', space=vmem, size = 0x10000, scoped, tag = 'output window, operand 0']
    %9 = vsyncpa [#allocation5], 0
    %s10 = scalar_lea.sflag [#allocation5], 1
    %11 = vsyncpa %s10, 0
    %12 = vsyncpa [#allocation8], 0
    %13 = vsyncpa [#allocation6], 0
    %s14 = scalar_lea.sflag [#allocation6], 1
    %15 = vsyncpa %s14, 0
    loop: start=0, step=1, limit=4
    $region2: #{tpu_custom_call.1} parent=1 // loop_pre_header
      _
    $region3: #{tpu_custom_call.1} parent=1 // loop_header
      %s17 = sphi 0, %s21
      %p18 = scmp.ge.s32.totalorder %s17, 4
      %s27 = sphi 0, %s29
      %s30 = sphi 0, %s27
      %s31 = sphi 0, %s30
      %s47 = sphi 0, %s31
      %s51 = sphi 0, %s51
      %s53 = sphi 0, %s51
      %s54 = sphi 0, %s53
      %s68 = sphi 0, %s54
      %s72 = sphi 0, %s72
      %s74 = sphi 0, %s72
      %s75 = sphi 0, %s74
      %s89 = sphi 0, %s75
      %s93 = sphi 0, %s93
      %s95 = sphi 0, %s93
      %s96 = sphi 0, %s95
      %s110 = sphi 0, %s96
      %s116 = sphi 0, %s118
      %s119 = sphi 0, %s116
      %s120 = sphi 0, %s119
      %s136 = sphi 0, %s120
    $region4: #{tpu_custom_call.1} parent=1 // loop_header_branch
      %20 = sbr.rel (%p18) target = $region8
    $region5: #{tpu_custom_call.1} parent=1 // loop_body
      %s22 = ssub.s32 %s17, 1
      %s23 = ssub.s32 %s17, 2
      %s24 = sadd.s32 %s17, 1
      %s25 = ssub.s32 %s17, %s24
      %p26 = scmp.eq.s32.totalorder %s25, 0
      %s28 = sadd.s32 %s27, 1
      %s29 = scalar_select %p26, %s27, %s28
      %p32 = pneg %p26
      %p33 = scmp.eq.s32.totalorder %s17, 1
      %p34 = por %p32, %p33
      %p35 = scmp.ne.s32.totalorder %s27, %s30
      %p36 = scmp.eq.s32.totalorder %s17, 0
      %p37 = por %p35, %p36
      %p38 = scmp.ne.s32.totalorder %s27, %s30
      %p39 = scmp.eq.s32.totalorder %s22, 1
      %p40 = por %p38, %p39
      %p41 = scmp.ne.s32.totalorder %s30, %s31
      %p42 = scmp.eq.s32.totalorder %s22, 0
      %p43 = por %p41, %p42
      %p44 = scmp.ne.s32.totalorder %s30, %s31
      %p45 = scmp.eq.s32.totalorder %s23, 1
      %p46 = por %p44, %p45
      %p48 = scmp.ne.s32.totalorder %s31, %s47
      %p49 = scmp.eq.s32.totalorder %s23, 0
      %p50 = por %p48, %p49
      %s52 = sadd.s32 %s51, 1
      %p55 = scmp.eq.s32.totalorder %s17, 1
      %p56 = scmp.ne.s32.totalorder %s51, %s53
      %p57 = scmp.eq.s32.totalorder %s17, 0
      %p58 = por %p56, %p57
      %p59 = scmp.ne.s32.totalorder %s51, %s53
      %p60 = scmp.eq.s32.totalorder %s22, 1
      %p61 = por %p59, %p60
      %p62 = scmp.ne.s32.totalorder %s53, %s54
      %p63 = scmp.eq.s32.totalorder %s22, 0
      %p64 = por %p62, %p63
      %p65 = scmp.ne.s32.totalorder %s53, %s54
      %p66 = scmp.eq.s32.totalorder %s23, 1
      %p67 = por %p65, %p66
      %p69 = scmp.ne.s32.totalorder %s54, %s68
      %p70 = scmp.eq.s32.totalorder %s23, 0
      %p71 = por %p69, %p70
      %s73 = sadd.s32 %s72, 1
      %p76 = scmp.eq.s32.totalorder %s17, 1
      %p77 = scmp.ne.s32.totalorder %s72, %s74
      %p78 = scmp.eq.s32.totalorder %s17, 0
      %p79 = por %p77, %p78
      %p80 = scmp.ne.s32.totalorder %s72, %s74
      %p81 = scmp.eq.s32.totalorder %s22, 1
      %p82 = por %p80, %p81
      %p83 = scmp.ne.s32.totalorder %s74, %s75
      %p84 = scmp.eq.s32.totalorder %s22, 0
      %p85 = por %p83, %p84
      %p86 = scmp.ne.s32.totalorder %s74, %s75
      %p87 = scmp.eq.s32.totalorder %s23, 1
      %p88 = por %p86, %p87
      %p90 = scmp.ne.s32.totalorder %s75, %s89
      %p91 = scmp.eq.s32.totalorder %s23, 0
      %p92 = por %p90, %p91
      %s94 = sadd.s32 %s93, 1
      %p97 = scmp.eq.s32.totalorder %s17, 1
      %p98 = scmp.ne.s32.totalorder %s93, %s95
      %p99 = scmp.eq.s32.totalorder %s17, 0
      %p100 = por %p98, %p99
      %p101 = scmp.ne.s32.totalorder %s93, %s95
      %p102 = scmp.eq.s32.totalorder %s22, 1
      %p103 = por %p101, %p102
      %p104 = scmp.ne.s32.totalorder %s95, %s96
      %p105 = scmp.eq.s32.totalorder %s22, 0
      %p106 = por %p104, %p105
      %p107 = scmp.ne.s32.totalorder %s95, %s96
      %p108 = scmp.eq.s32.totalorder %s23, 1
      %p109 = por %p107, %p108
      %p111 = scmp.ne.s32.totalorder %s96, %s110
      %p112 = scmp.eq.s32.totalorder %s23, 0
      %p113 = por %p111, %p112
      %s114 = ssub.s32 %s17, %s24
      %p115 = scmp.eq.s32.totalorder %s114, 0
      %s117 = sadd.s32 %s116, 1
      %s118 = scalar_select %p115, %s116, %s117
      %p121 = pneg %p115
      %p122 = scmp.eq.s32.totalorder %s17, 1
      %p123 = por %p121, %p122
      %p124 = scmp.ne.s32.totalorder %s116, %s119
      %p125 = scmp.eq.s32.totalorder %s17, 0
      %p126 = por %p124, %p125
      %p127 = scmp.ne.s32.totalorder %s116, %s119
      %p128 = scmp.eq.s32.totalorder %s22, 1
      %p129 = por %p127, %p128
      %p130 = scmp.ne.s32.totalorder %s119, %s120
      %p131 = scmp.eq.s32.totalorder %s22, 0
      %p132 = por %p130, %p131
      %p133 = scmp.ne.s32.totalorder %s119, %s120
      %p134 = scmp.eq.s32.totalorder %s23, 1
      %p135 = por %p133, %p134
      %p137 = scmp.ne.s32.totalorder %s120, %s136
      %p138 = scmp.eq.s32.totalorder %s23, 0
      %p139 = por %p137, %p138
      %p140 = scmp.le.s32.totalorder 1, %s17
      %p141 = scmp.lt.s32.totalorder %s17, 3
      %p142 = pnand %p140, %p141
      %p143 = pneg %p142
      // Predicated region
      $region9: #{tpu_custom_call.1} parent=5 // pred_check
        _
      $region10: #{tpu_custom_call.1} parent=5 // pred_check_branch
        %145 = sbr.rel (%p142) target = $region12
      $region11: #{tpu_custom_call.1} parent=5 // pred_region
        %s146 = ssub.s32 %s17, 1
        // Predicated region
        $region13: #{tpu_custom_call.1} parent=11 // pred_check
          %p147 = pneg %p64
        $region14: #{tpu_custom_call.1} parent=11 // pred_check_branch
          %149 = sbr.rel (%p147) target = $region16
        $region15: #{tpu_custom_call.1} parent=11 // pred_region
          _
        $region16: #{tpu_custom_call.1} parent=11 // pred_fallthru
          _
        // Predicated region
        $region17: #{tpu_custom_call.1} parent=11 // pred_check
          %p150 = pneg %p85
        $region18: #{tpu_custom_call.1} parent=11 // pred_check_branch
          %152 = sbr.rel (%p150) target = $region20
        $region19: #{tpu_custom_call.1} parent=11 // pred_region
          _
        $region20: #{tpu_custom_call.1} parent=11 // pred_fallthru
          _
        // Predicated region
        $region21: #{tpu_custom_call.1} parent=11 // pred_check
          %p153 = pneg %p106
        $region22: #{tpu_custom_call.1} parent=11 // pred_check_branch
          %155 = sbr.rel (%p153) target = $region24
        $region23: #{tpu_custom_call.1} parent=11 // pred_region
          %157 = vsyncadd [#allocation8], 0
          %s158 = sshll.u32 %s3, 4
          %s159 = int_to_ptr.hbm [resolvable:$true] %s158
          %s160 = sshll.u32 [#allocation7], 4
          %s161 = int_to_ptr.vmem [resolvable:$true] %s160
          %166 = dma.hbm_to_vmem [thread:$0]  %s159, 2048, %s161, [#allocation8], 128, 128, 8
        $region24: #{tpu_custom_call.1} parent=11 // pred_fallthru
          _
      $region12: #{tpu_custom_call.1} parent=5 // pred_fallthru
        _
      %p167 = scmp.lt.s32.totalorder %s17, 2
      // Predicated region
      $region25: #{tpu_custom_call.1} parent=5 // pred_check
        %p168 = pneg %p167
      $region26: #{tpu_custom_call.1} parent=5 // pred_check_branch
        %170 = sbr.rel (%p168) target = $region28
      $region27: #{tpu_custom_call.1} parent=5 // pred_region
        // Predicated region
        $region29: #{tpu_custom_call.1} parent=27 // pred_check
          %p171 = pneg %p37
        $region30: #{tpu_custom_call.1} parent=27 // pred_check_branch
          %173 = sbr.rel (%p171) target = $region32
        $region31: #{tpu_custom_call.1} parent=27 // pred_region
          %s174 = sand.u32 %s27, 1
          %s175 = scalar_lea.sflag [#allocation5], %s174
          %s176 = sand.u32 %s27, 1
          %s177 = smul.addr %s176, 8
          %s178 = scalar_lea.vmem [#allocation4], %s177
          %180 = vsyncadd %s175, 0
          %s181 = smul.addr %s17, 2
          %s182 = smul.addr %s181, 4
          %s183 = scalar_lea.hbm %s0, %s182
          %s185 = sshll.u32 %s183, 4
          %s186 = int_to_ptr.hbm [resolvable:$true] %s185
          %s187 = sshll.u32 %s178, 4
          %s188 = int_to_ptr.vmem [resolvable:$true] %s187
          %190 = dma.hbm_to_vmem [thread:$0]  %s186, 128, %s188, %s175
        $region32: #{tpu_custom_call.1} parent=27 // pred_fallthru
          _
      $region28: #{tpu_custom_call.1} parent=5 // pred_fallthru
        _
      %p191 = scmp.le.s32.totalorder 1, %s17
      %p192 = scmp.lt.s32.totalorder %s17, 3
      %p193 = pnand %p191, %p192
      %p194 = pneg %p193
      // Predicated region
      $region33: #{tpu_custom_call.1} parent=5 // pred_check
        _
      $region34: #{tpu_custom_call.1} parent=5 // pred_check_branch
        %196 = sbr.rel (%p193) target = $region36
      $region35: #{tpu_custom_call.1} parent=5 // pred_region
        %s197 = ssub.s32 %s17, 1
        %s198 = sand.u32 %s30, 1
        %s199 = scalar_lea.sflag [#allocation5], %s198
        %s200 = sand.u32 %s30, 1
        %s201 = smul.addr %s200, 8
        %s202 = scalar_lea.vmem [#allocation4], %s201
        // Predicated region
        $region37: #{tpu_custom_call.1} parent=35 // pred_check
          %p203 = pneg %p43
        $region38: #{tpu_custom_call.1} parent=35 // pred_check_branch
          %205 = sbr.rel (%p203) target = $region40
        $region39: #{tpu_custom_call.1} parent=35 // pred_region
          %207 = dma.done %s199, 128
        $region40: #{tpu_custom_call.1} parent=35 // pred_fallthru
          _
        // Predicated region
        $region41: #{tpu_custom_call.1} parent=35 // pred_check
          %p208 = pneg %p106
        $region42: #{tpu_custom_call.1} parent=35 // pred_check_branch
          %210 = sbr.rel (%p208) target = $region44
        $region43: #{tpu_custom_call.1} parent=35 // pred_region
          %212 = dma.done [#allocation8], 2048
        $region44: #{tpu_custom_call.1} parent=35 // pred_fallthru
          _
        %s213 = sand.u32 %s30, 1
        %s214 = scalar_lea.sflag [#allocation5], %s213
        %s215 = sand.u32 %s30, 1
        %s216 = smul.addr %s215, 8
        %s217 = scalar_lea.vmem [#allocation4], %s216
        %p218 = pneg %p43
        %p219 = pneg %p40
        %p220 = pneg %p64
        %p221 = pneg %p61
        %p222 = pneg %p85
        %p223 = pneg %p82
        %p224 = pneg %p106
        %p225 = pneg %p103
        %p226 = pneg %p132
        %p227 = pneg %p129
        %s228 = sand.u32 %s119, 1
        %s229 = scalar_lea.sflag [#allocation6], %s228
        %s230 = sand.u32 %s119, 1
        %s231 = smul.addr %s230, 64
        %s232 = scalar_lea.vmem [#allocation9], %s231
        %233 = vst [vmem:[#allocation2] sm:$0xf] 0.0
        %234 = vst [vmem:[#allocation2 + $0xc] sm:$0xf] 0.0
        %v235 = vld [vmem:[%s202] sm:$0xff]
        %236 = vst [vmem:[#allocation2 + $0x4] sm:$0xff] %v235
        %v237 = vld [vmem:[#allocation2] sm:$0xff]
        %v238 = vld [vmem:[#allocation2 + $0x8] sm:$0xff]
        %v239 = vlaneseq
        %v240 = vand.u32 %v239, 127
        %v241 = vadd.s32 %v240, 128
        %vm242 = vcmp.lt.s32.totalorder %v240, 0
        %v243 = vsub.s32 0, %v240
        %v244 = vsel %vm242, %v243, %v240
        %v245 = vshrl.u32 %v244, 4
        %v246 = vand.u32 %v244, 15
        %v247 = vsub.s32 0, %v246
        %v248 = vsel %vm242, %v247, %v246
        %vm249 = vcmp.lt.s32.totalorder %v241, 0
        %v250 = vsub.s32 0, %v241
        %v251 = vsel %vm249, %v250, %v241
        %v252 = vshrl.u32 %v251, 4
        %v253 = vand.u32 %v251, 15
        %v254 = vsub.s32 0, %v253
        %v255 = vsel %vm249, %v254, %v253
        %vm256 = vcmp.ne.s32.totalorder %v248, 0
        %vm257 = vcmp.ne.s32.totalorder %v255, 0
        %vm258 = vcmp.lt.s32.totalorder %v248, 0
        %vm259 = vcmp.lt.s32.totalorder %v255, 0
        %vm260 = vmand %vm258, %vm256
        %vm261 = vmand %vm259, %vm257
        %v262 = vadd.s32 %v248, 16
        %v263 = vadd.s32 %v255, 16
        %v264 = vsel %vm260, %v262, %v248
        %v265 = vsel %vm261, %v263, %v255
        %vm266 = vcmp.ne.s32.totalorder %v264, 15
        %vm267 = vcmp.ne.s32.totalorder %v265, 15
        %v268 = vsel %vm266, 1, 0
        %v269 = vsel %vm267, 1, 0
        %v270 = vcvt.s32.f32 %v268
        %v271 = vcvt.s32.f32 %v269
        %vm272 = vcmp.ne.s32.totalorder %v264, 0
        %vm273 = vcmp.ne.s32.totalorder %v265, 0
        %v274 = vsel %vm272, 1, 0
        %v275 = vsel %vm273, 1, 0
        %v276 = vcvt.s32.f32 %v274
        %v277 = vcvt.s32.f32 %v275
        %280 = vrot.lane.b32.xlu0 %v237, 111
        %v281 = vpop.permute.xlu0 %280
        %282 = vrot.lane.b32.xlu0 %v238, 111
        %v283 = vpop.permute.xlu0 %282
        %v284 = vrot.slane %v281, 4
        %v285 = vrot.slane %v283, 4
        %vm286 = vcmask 1043456
        %v287 = vsel %vm286, %v284, %v285
        %vm288 = vcmask 908288
        %v289 = vsel %vm288, %v287, %v283
        %v293 = vrot.slane %v271, 4
        %v294 = vsel %vm286, %v270, %v293
        %v296 = vmul.f32 %v289, %v294
        %298 = vst [vmem:[#allocation1] ss:$2 sm:$0xff] %v296
        %v299 = vld.sshfl [vmem:[#allocation1] sm:$0xff pattern:$0x75316420]
        %v300 = vld.sshfl [vmem:[#allocation1 + $0x8] sm:$0xff pattern:$0x75316420]
        %303 = vst [vmem:[#allocation3] sm:$0xf] %v299
        %304 = vst [vmem:[#allocation3 + $0x8] sm:$0xf] %v300
        %s305 = scalar_lea.vmem [#allocation1], 1
        %306 = vst [vmem:[%s305] ss:$2 sm:$0xff] %v237
        %s307 = scalar_lea.vmem [#allocation1], 17
        %308 = vst [vmem:[%s307] ss:$2 sm:$0xff] %v238
        %v309 = vld.sshfl [vmem:[#allocation1 + $0x8] sm:$0xff pattern:$0x75316420]
        %v310 = vld.sshfl [vmem:[#allocation1 + $0x10] sm:$0xff pattern:$0x75316420]
        %v311 = vld.sshfl [vmem:[#allocation1 + $0x18] sm:$0xff pattern:$0x75316420]
        %312 = vrot.lane.b32.xlu0 %v309, 112
        %v313 = vpop.permute.xlu0 %312
        %314 = vrot.lane.b32.xlu0 %v310, 112
        %v315 = vpop.permute.xlu0 %314
        %316 = vrot.lane.b32.xlu0 %v311, 112
        %v317 = vpop.permute.xlu0 %316
        %vm318 = vcmask 916480
        %v319 = vsel %vm318, %v313, %v315
        %v320 = vsel %vm318, %v315, %v317
        %323 = vst [vmem:[#allocation3] sm:$0xf0] %v319
        %324 = vst [vmem:[#allocation3 + $0x8] sm:$0xf0] %v320
        %325 = vrot.lane.b32.xlu0 %v237, 113
        %v326 = vpop.permute.xlu0 %325
        %327 = vrot.lane.b32.xlu0 %v238, 113
        %v328 = vpop.permute.xlu0 %327
        %v329 = vrot.slane %v326, 4
        %v330 = vrot.slane %v328, 4
        %v331 = vsel %vm286, %v329, %v330
        %vm332 = vcmask 924672
        %v333 = vsel %vm332, %v331, %v328
        %v337 = vrot.slane %v277, 4
        %v338 = vsel %vm286, %v276, %v337
        %v340 = vmul.f32 %v333, %v338
        %342 = vst [vmem:[#allocation1] ss:$2 sm:$0xff] %v340
        %v343 = vld.sshfl [vmem:[#allocation1] sm:$0xff pattern:$0x75316420]
        %v344 = vld.sshfl [vmem:[#allocation1 + $0x8] sm:$0xff pattern:$0x75316420]
        %347 = vst [vmem:[#allocation3 + $0x10] sm:$0xf] %v343
        %348 = vst [vmem:[#allocation3 + $0x18] sm:$0xf] %v344
        %349 = vrot.lane.b32.xlu0 %v237, 127
        %v350 = vpop.permute.xlu0 %349
        %351 = vrot.lane.b32.xlu0 %v238, 127
        %v352 = vpop.permute.xlu0 %351
        %v353 = vrot.slane %v350, 4
        %v354 = vrot.slane %v352, 4
        %v355 = vsel %vm286, %v353, %v354
        %vm356 = vcmask 1039360
        %v357 = vsel %vm356, %v355, %v352
        %v359 = vmul.f32 %v357, %v294
        %s361 = scalar_lea.vmem [#allocation1], 1
        %362 = vst [vmem:[%s361] ss:$2 sm:$0xff] %v359
        %v363 = vld.sshfl [vmem:[#allocation1] sm:$0xff pattern:$0x75316420]
        %v364 = vld.sshfl [vmem:[#allocation1 + $0x8] sm:$0xff pattern:$0x75316420]
        %367 = vst [vmem:[#allocation3 + $0x10] sm:$0xf0] %v363
        %368 = vst [vmem:[#allocation3 + $0x18] sm:$0xf0] %v364
        %369 = vst [vmem:[#allocation1] ss:$2 sm:$0xff] %v237
        %s370 = scalar_lea.vmem [#allocation1], 16
        %371 = vst [vmem:[%s370] ss:$2 sm:$0xff] %v238
        %v372 = vld.sshfl [vmem:[#allocation1 + $0x8] sm:$0xff pattern:$0x75316420]
        %v373 = vld.sshfl [vmem:[#allocation1 + $0x10] sm:$0xff pattern:$0x75316420]
        %376 = vst [vmem:[#allocation3 + $0x20] sm:$0xf] %v372
        %377 = vst [vmem:[#allocation3 + $0x28] sm:$0xf] %v373
        %378 = vrot.lane.b32.xlu0 %v338, 127
        %v379 = vpop.permute.xlu0 %378
        %v380 = vrot.slane %v379, 4
        %v381 = vsel %vm356, %v380, %v379
        %v384 = vmul.f32 %v237, %v381
        %v385 = vmul.f32 %v238, %v380
        %s388 = scalar_lea.vmem [#allocation1], 1
        %389 = vst [vmem:[%s388] ss:$2 sm:$0xff] %v384
        %s390 = scalar_lea.vmem [#allocation1], 17
        %391 = vst [vmem:[%s390] ss:$2 sm:$0xff] %v385
        %v392 = vld.sshfl [vmem:[#allocation1] sm:$0xff pattern:$0x75316420]
        %v393 = vld.sshfl [vmem:[#allocation1 + $0x8] sm:$0xff pattern:$0x75316420]
        %v394 = vld.sshfl [vmem:[#allocation1 + $0x10] sm:$0xff pattern:$0x75316420]
        %395 = vrot.lane.b32.xlu0 %v392, 1
        %v396 = vpop.permute.xlu0 %395
        %397 = vrot.lane.b32.xlu0 %v393, 1
        %v398 = vpop.permute.xlu0 %397
        %399 = vrot.lane.b32.xlu0 %v394, 1
        %v400 = vpop.permute.xlu0 %399
        %vm401 = vcmask 7168
        %v402 = vsel %vm401, %v396, %v398
        %v403 = vsel %vm401, %v398, %v400
        %406 = vst [vmem:[#allocation3 + $0x20] sm:$0xf0] %v402
        %407 = vst [vmem:[#allocation3 + $0x28] sm:$0xf0] %v403
        %408 = vrot.lane.b32.xlu0 %v294, 113
        %v409 = vpop.permute.xlu0 %408
        %v410 = vrot.slane %v409, 4
        %v411 = vsel %vm332, %v410, %v409
        %v414 = vmul.f32 %v237, %v411
        %v415 = vmul.f32 %v238, %v410
        %418 = vst [vmem:[#allocation1] ss:$2 sm:$0xff] %v414
        %s419 = scalar_lea.vmem [#allocation1], 16
        %420 = vst [vmem:[%s419] ss:$2 sm:$0xff] %v415
        %v421 = vld.sshfl [vmem:[#allocation1] sm:$0xff pattern:$0x75316420]
        %v422 = vld.sshfl [vmem:[#allocation1 + $0x8] sm:$0xff pattern:$0x75316420]
        %v423 = vld.sshfl [vmem:[#allocation1 + $0x10] sm:$0xff pattern:$0x75316420]
        %424 = vrot.lane.b32.xlu0 %v421, 15
        %v425 = vpop.permute.xlu0 %424
        %426 = vrot.lane.b32.xlu0 %v422, 15
        %v427 = vpop.permute.xlu0 %426
        %428 = vrot.lane.b32.xlu0 %v423, 15
        %v429 = vpop.permute.xlu0 %428
        %vm430 = vcmask 121856
        %v431 = vsel %vm430, %v425, %v427
        %v432 = vsel %vm430, %v427, %v429
        %435 = vst [vmem:[#allocation3 + $0x30] sm:$0xf] %v431
        %436 = vst [vmem:[#allocation3 + $0x38] sm:$0xf] %v432
        %s437 = scalar_lea.vmem [#allocation1], 1
        %438 = vst [vmem:[%s437] ss:$2 sm:$0xff] %v237
        %s439 = scalar_lea.vmem [#allocation1], 17
        %440 = vst [vmem:[%s439] ss:$2 sm:$0xff] %v238
        %v441 = vld.sshfl [vmem:[#allocation1] sm:$0xff pattern:$0x75316420]
        %v442 = vld.sshfl [vmem:[#allocation1 + $0x8] sm:$0xff pattern:$0x75316420]
        %v443 = vld.sshfl [vmem:[#allocation1 + $0x10] sm:$0xff pattern:$0x75316420]
        %444 = vrot.lane.b32.xlu0 %v441, 16
        %v445 = vpop.permute.xlu0 %444
        %446 = vrot.lane.b32.xlu0 %v442, 16
        %v447 = vpop.permute.xlu0 %446
        %448 = vrot.lane.b32.xlu0 %v443, 16
        %v449 = vpop.permute.xlu0 %448
        %vm450 = vcmask 130048
        %v451 = vsel %vm450, %v445, %v447
        %v452 = vsel %vm450, %v447, %v449
        %455 = vst [vmem:[#allocation3 + $0x30] sm:$0xf0] %v451
        %456 = vst [vmem:[#allocation3 + $0x38] sm:$0xf0] %v452
        %457 = vrot.lane.b32.xlu0 %v338, 111
        %v458 = vpop.permute.xlu0 %457
        %v459 = vrot.slane %v458, 4
        %v460 = vsel %vm288, %v459, %v458
        %v463 = vmul.f32 %v237, %v460
        %v464 = vmul.f32 %v238, %v459
        %467 = vst [vmem:[#allocation1] ss:$2 sm:$0xff] %v463
        %s468 = scalar_lea.vmem [#allocation1], 16
        %469 = vst [vmem:[%s468] ss:$2 sm:$0xff] %v464
        %v470 = vld.sshfl [vmem:[#allocation1] sm:$0xff pattern:$0x75316420]
        %v471 = vld.sshfl [vmem:[#allocation1 + $0x8] sm:$0xff pattern:$0x75316420]
        %v472 = vld.sshfl [vmem:[#allocation1 + $0x10] sm:$0xff pattern:$0x75316420]
        %473 = vrot.lane.b32.xlu0 %v470, 17
        %v474 = vpop.permute.xlu0 %473
        %475 = vrot.lane.b32.xlu0 %v471, 17
        %v476 = vpop.permute.xlu0 %475
        %477 = vrot.lane.b32.xlu0 %v472, 17
        %v478 = vpop.permute.xlu0 %477
        %vm479 = vcmask 138240
        %v480 = vsel %vm479, %v474, %v476
        %v481 = vsel %vm479, %v476, %v478
        %484 = vst [vmem:[#allocation3 + $0x40] sm:$0xf] %v480
        %485 = vst [vmem:[#allocation3 + $0x48] sm:$0xf] %v481
        %v486 = vld [vmem:[%s1] sm:$0xff]
        %v487 = vld [vmem:[%s1 + $0x8] sm:$0xff]
        %v488 = vld [vmem:[%s1 + $0x10] sm:$0xff]
        %v489 = vld [vmem:[%s1 + $0x18] sm:$0xff]
        %v490 = vld [vmem:[#allocation3] sm:$0xff]
        %v491 = vld [vmem:[#allocation3 + $0x8] sm:$0xff]
        %v492 = vld [vmem:[#allocation3 + $0x10] sm:$0xff]
        %v493 = vld [vmem:[#allocation3 + $0x18] sm:$0xff]
        %v494 = vld [vmem:[#allocation3 + $0x20] sm:$0xff]
        %v495 = vld [vmem:[#allocation3 + $0x28] sm:$0xff]
        %v496 = vld [vmem:[#allocation3 + $0x30] sm:$0xff]
        %v497 = vld [vmem:[#allocation3 + $0x38] sm:$0xff]
        %v498 = vld [vmem:[#allocation3 + $0x40] sm:$0xf]
        %v499 = vld [vmem:[#allocation3 + $0x48] sm:$0xf]
        %v500 = vld [vmem:[%s2] sm:$0xff]
        %v501 = vld [vmem:[%s2 + $0x8] sm:$0xff]
        %v502 = vld [vmem:[%s2 + $0x10] sm:$0xff]
        %v503 = vld [vmem:[%s2 + $0x18] sm:$0xff]
        %505 = vset.pattern.permute.xlu0 0
        %506 = vperm.xlu0 %505, %v500
        %v507 = vpop.permute.xlu0 %506
        %510 = vset.pattern.permute.xlu0 0
        %511 = vperm.xlu0 %510, %v501
        %v512 = vpop.permute.xlu0 %511
        %515 = vset.pattern.permute.xlu0 0
        %516 = vperm.xlu0 %515, %v502
        %v517 = vpop.permute.xlu0 %516
        %520 = vset.pattern.permute.xlu0 0
        %521 = vperm.xlu0 %520, %v503
        %v522 = vpop.permute.xlu0 %521
        %vm524 = vcmask 293888
        %v526 = vsel %vm524, %v486, 0
        %v529 = vsel %vm524, %v487, 0
        %v532 = vsel %vm524, %v488, 0
        %v535 = vsel %vm524, %v489, 0
        %v538 = vsel %vm286, %v498, 0
        %v541 = vsel %vm286, %v499, 0
        %543 = vmatpush.msra.mxu0 0.0
        %544 = vmatpush.msra.mxu0 0.0
        %545 = vmatpush.msra.mxu0 0.0
        %546 = vmatpush.msra.mxu0 0.0
        %547 = vmatpush.msra.mxu0 0.0
        %548 = vmatpush.msra.mxu0 0.0
        %549 = vmatpush.msra.mxu0 0.0
        %550 = vmatpush.msra.mxu0 0.0
        %551 = vmatpush.msra.mxu0 0.0
        %552 = vmatpush.msra.mxu0 0.0
        %553 = vmatpush.msra.mxu0 0.0
        %554 = vmatpush.msra.mxu0 %v538
        %555 = vmatpush.msra.mxu0 %v496
        %556 = vmatpush.msra.mxu0 %v494
        %557 = vmatpush.msra.mxu0 %v492
        %558 = vmatpush.msra.mxu0 %v490
        %559 = vmatmul.f32.gmra.mxu0 %v526
        %v560 = vpop.f32.mrf.mxu0
        %v561 = vadd.f32 %v507, %v560
        %562 = vmatmul.f32.gmra.mxu0 %v529
        %v563 = vpop.f32.mrf.mxu0
        %v564 = vadd.f32 %v512, %v563
        %565 = vmatmul.f32.gmra.mxu0 %v532
        %v566 = vpop.f32.mrf.mxu0
        %v567 = vadd.f32 %v517, %v566
        %568 = vmatmul.f32.gmra.mxu0 %v535
        %v569 = vpop.f32.mrf.mxu0
        %v570 = vadd.f32 %v522, %v569
        %571 = vdwg.mxu0
        %572 = vmatpush.msra.mxu0 0.0
        %573 = vmatpush.msra.mxu0 0.0
        %574 = vmatpush.msra.mxu0 0.0
        %575 = vmatpush.msra.mxu0 0.0
        %576 = vmatpush.msra.mxu0 0.0
        %577 = vmatpush.msra.mxu0 0.0
        %578 = vmatpush.msra.mxu0 0.0
        %579 = vmatpush.msra.mxu0 0.0
        %580 = vmatpush.msra.mxu0 0.0
        %581 = vmatpush.msra.mxu0 0.0
        %582 = vmatpush.msra.mxu0 0.0
        %583 = vmatpush.msra.mxu0 %v541
        %584 = vmatpush.msra.mxu0 %v497
        %585 = vmatpush.msra.mxu0 %v495
        %586 = vmatpush.msra.mxu0 %v493
        %587 = vmatpush.msra.mxu0 %v491
        %588 = vmatmul.f32.gmra.mxu0 %v526
        %v589 = vpop.f32.mrf.mxu0
        %v590 = vadd.f32 %v507, %v589
        %591 = vmatmul.f32.gmra.mxu0 %v529
        %v592 = vpop.f32.mrf.mxu0
        %v593 = vadd.f32 %v512, %v592
        %594 = vmatmul.f32.gmra.mxu0 %v532
        %v595 = vpop.f32.mrf.mxu0
        %v596 = vadd.f32 %v517, %v595
        %597 = vmatmul.f32.gmra.mxu0 %v535
        %v598 = vpop.f32.mrf.mxu0
        %v599 = vadd.f32 %v522, %v598
        %600 = vdwg.mxu0
        %v601 = vmax.f32 %v561, 0.0
        %v602 = vmax.f32 %v590, 0.0
        %v603 = vmax.f32 %v564, 0.0
        %v604 = vmax.f32 %v593, 0.0
        %v605 = vmax.f32 %v567, 0.0
        %v606 = vmax.f32 %v596, 0.0
        %v607 = vmax.f32 %v570, 0.0
        %v608 = vmax.f32 %v599, 0.0
        %v609 = vld [vmem:[#allocation7] sm:$0xff]
        %v610 = vld [vmem:[#allocation7 + $0x8] sm:$0xff]
        %v611 = vld [vmem:[#allocation7 + $0x10] sm:$0xff]
        %v612 = vld [vmem:[#allocation7 + $0x18] sm:$0xff]
        %s613 = scalar_lea.vmem [#allocation7], 32
        %v614 = vld [vmem:[%s613] sm:$0xff]
        %v615 = vld [vmem:[%s613 + $0x8] sm:$0xff]
        %v616 = vld [vmem:[%s613 + $0x10] sm:$0xff]
        %v617 = vld [vmem:[%s613 + $0x18] sm:$0xff]
        %s618 = scalar_lea.vmem [#allocation7], 64
        %v619 = vld [vmem:[%s618] sm:$0xff]
        %v620 = vld [vmem:[%s618 + $0x8] sm:$0xff]
        %v621 = vld [vmem:[%s618 + $0x10] sm:$0xff]
        %v622 = vld [vmem:[%s618 + $0x18] sm:$0xff]
        %s623 = scalar_lea.vmem [#allocation7], 96
        %v624 = vld [vmem:[%s623] sm:$0xff]
        %v625 = vld [vmem:[%s623 + $0x8] sm:$0xff]
        %v626 = vld [vmem:[%s623 + $0x10] sm:$0xff]
        %v627 = vld [vmem:[%s623 + $0x18] sm:$0xff]
        %vm628 = vcmask 261120
        %v630 = vsel %vm628, %v603, 0
        %632 = vmatpush.msra.mxu0 0.0
        %633 = vmatpush.msra.mxu0 0.0
        %634 = vmatpush.msra.mxu0 0.0
        %635 = vmatpush.msra.mxu0 0.0
        %636 = vmatpush.msra.mxu0 0.0
        %637 = vmatpush.msra.mxu0 0.0
        %638 = vmatpush.msra.mxu0 0.0
        %639 = vmatpush.msra.mxu0 0.0
        %640 = vmatpush.msra.mxu0 0.0
        %641 = vmatpush.msra.mxu0 0.0
        %642 = vmatpush.msra.mxu0 0.0
        %643 = vmatpush.msra.mxu0 0.0
        %644 = vmatpush.msra.mxu0 %v617
        %645 = vmatpush.msra.mxu0 %v616
        %646 = vmatpush.msra.mxu0 %v615
        %647 = vmatpush.msra.mxu0 %v614
        %648 = vmatmul.f32.gmra.mxu0 %v630
        %v649 = vpop.f32.mrf.mxu0
        %v650 = vadd.f32 0.0, %v649
        %651 = vdwg.mxu0
        %v653 = vsel %vm628, %v601, 0
        %655 = vmatpush.msra.mxu0 0.0
        %656 = vmatpush.msra.mxu0 0.0
        %657 = vmatpush.msra.mxu0 0.0
        %658 = vmatpush.msra.mxu0 0.0
        %659 = vmatpush.msra.mxu0 0.0
        %660 = vmatpush.msra.mxu0 0.0
        %661 = vmatpush.msra.mxu0 0.0
        %662 = vmatpush.msra.mxu0 0.0
        %663 = vmatpush.msra.mxu0 0.0
        %664 = vmatpush.msra.mxu0 0.0
        %665 = vmatpush.msra.mxu0 0.0
        %666 = vmatpush.msra.mxu0 0.0
        %667 = vmatpush.msra.mxu0 %v612
        %668 = vmatpush.msra.mxu0 %v611
        %669 = vmatpush.msra.mxu0 %v610
        %670 = vmatpush.msra.mxu0 %v609
        %671 = vmatmul.f32.gmra.mxu0 %v653
        %v672 = vpop.f32.mrf.mxu0
        %v673 = vadd.f32 %v650, %v672
        %674 = vdwg.mxu0
        %v676 = vsel %vm628, %v605, 0
        %678 = vmatpush.msra.mxu0 0.0
        %679 = vmatpush.msra.mxu0 0.0
        %680 = vmatpush.msra.mxu0 0.0
        %681 = vmatpush.msra.mxu0 0.0
        %682 = vmatpush.msra.mxu0 0.0
        %683 = vmatpush.msra.mxu0 0.0
        %684 = vmatpush.msra.mxu0 0.0
        %685 = vmatpush.msra.mxu0 0.0
        %686 = vmatpush.msra.mxu0 0.0
        %687 = vmatpush.msra.mxu0 0.0
        %688 = vmatpush.msra.mxu0 0.0
        %689 = vmatpush.msra.mxu0 0.0
        %690 = vmatpush.msra.mxu0 %v622
        %691 = vmatpush.msra.mxu0 %v621
        %692 = vmatpush.msra.mxu0 %v620
        %693 = vmatpush.msra.mxu0 %v619
        %694 = vmatmul.f32.gmra.mxu0 %v676
        %v695 = vpop.f32.mrf.mxu0
        %v696 = vadd.f32 0.0, %v695
        %697 = vdwg.mxu0
        %v698 = vadd.f32 %v673, %v696
        %v700 = vsel %vm628, %v607, 0
        %702 = vmatpush.msra.mxu0 0.0
        %703 = vmatpush.msra.mxu0 0.0
        %704 = vmatpush.msra.mxu0 0.0
        %705 = vmatpush.msra.mxu0 0.0
        %706 = vmatpush.msra.mxu0 0.0
        %707 = vmatpush.msra.mxu0 0.0
        %708 = vmatpush.msra.mxu0 0.0
        %709 = vmatpush.msra.mxu0 0.0
        %710 = vmatpush.msra.mxu0 0.0
        %711 = vmatpush.msra.mxu0 0.0
        %712 = vmatpush.msra.mxu0 0.0
        %713 = vmatpush.msra.mxu0 0.0
        %714 = vmatpush.msra.mxu0 %v627
        %715 = vmatpush.msra.mxu0 %v626
        %716 = vmatpush.msra.mxu0 %v625
        %717 = vmatpush.msra.mxu0 %v624
        %718 = vmatmul.f32.gmra.mxu0 %v700
        %v719 = vpop.f32.mrf.mxu0
        %v720 = vadd.f32 0.0, %v719
        %721 = vdwg.mxu0
        %v722 = vadd.f32 %v698, %v720
        %723 = vst [vmem:[%s232] sm:$0xff] %v722
        %724 = vrot.lane.b32.xlu0 %v603, 96
        %v725 = vpop.permute.xlu0 %724
        %v726 = vsel %vm628, %v725, 0
        %728 = vmatpush.msra.mxu0 0.0
        %729 = vmatpush.msra.mxu0 0.0
        %730 = vmatpush.msra.mxu0 0.0
        %731 = vmatpush.msra.mxu0 0.0
        %732 = vmatpush.msra.mxu0 0.0
        %733 = vmatpush.msra.mxu0 0.0
        %734 = vmatpush.msra.mxu0 0.0
        %735 = vmatpush.msra.mxu0 0.0
        %736 = vmatpush.msra.mxu0 0.0
        %737 = vmatpush.msra.mxu0 0.0
        %738 = vmatpush.msra.mxu0 0.0
        %739 = vmatpush.msra.mxu0 0.0
        %740 = vmatpush.msra.mxu0 %v617
        %741 = vmatpush.msra.mxu0 %v616
        %742 = vmatpush.msra.mxu0 %v615
        %743 = vmatpush.msra.mxu0 %v614
        %744 = vmatmul.f32.gmra.mxu0 %v726
        %v745 = vpop.f32.mrf.mxu0
        %v746 = vadd.f32 0.0, %v745
        %747 = vdwg.mxu0
        %748 = vrot.lane.b32.xlu0 %v601, 96
        %v749 = vpop.permute.xlu0 %748
        %v750 = vsel %vm628, %v749, 0
        %752 = vmatpush.msra.mxu0 0.0
        %753 = vmatpush.msra.mxu0 0.0
        %754 = vmatpush.msra.mxu0 0.0
        %755 = vmatpush.msra.mxu0 0.0
        %756 = vmatpush.msra.mxu0 0.0
        %757 = vmatpush.msra.mxu0 0.0
        %758 = vmatpush.msra.mxu0 0.0
        %759 = vmatpush.msra.mxu0 0.0
        %760 = vmatpush.msra.mxu0 0.0
        %761 = vmatpush.msra.mxu0 0.0
        %762 = vmatpush.msra.mxu0 0.0
        %763 = vmatpush.msra.mxu0 0.0
        %764 = vmatpush.msra.mxu0 %v612
        %765 = vmatpush.msra.mxu0 %v611
        %766 = vmatpush.msra.mxu0 %v610
        %767 = vmatpush.msra.mxu0 %v609
        %768 = vmatmul.f32.gmra.mxu0 %v750
        %v769 = vpop.f32.mrf.mxu0
        %v770 = vadd.f32 %v746, %v769
        %771 = vdwg.mxu0
        %772 = vrot.lane.b32.xlu0 %v605, 96
        %v773 = vpop.permute.xlu0 %772
        %v774 = vsel %vm628, %v773, 0
        %776 = vmatpush.msra.mxu0 0.0
        %777 = vmatpush.msra.mxu0 0.0
        %778 = vmatpush.msra.mxu0 0.0
        %779 = vmatpush.msra.mxu0 0.0
        %780 = vmatpush.msra.mxu0 0.0
        %781 = vmatpush.msra.mxu0 0.0
        %782 = vmatpush.msra.mxu0 0.0
        %783 = vmatpush.msra.mxu0 0.0
        %784 = vmatpush.msra.mxu0 0.0
        %785 = vmatpush.msra.mxu0 0.0
        %786 = vmatpush.msra.mxu0 0.0
        %787 = vmatpush.msra.mxu0 0.0
        %788 = vmatpush.msra.mxu0 %v622
        %789 = vmatpush.msra.mxu0 %v621
        %790 = vmatpush.msra.mxu0 %v620
        %791 = vmatpush.msra.mxu0 %v619
        %792 = vmatmul.f32.gmra.mxu0 %v774
        %v793 = vpop.f32.mrf.mxu0
        %v794 = vadd.f32 0.0, %v793
        %795 = vdwg.mxu0
        %v796 = vadd.f32 %v770, %v794
        %797 = vrot.lane.b32.xlu0 %v607, 96
        %v798 = vpop.permute.xlu0 %797
        %v799 = vsel %vm628, %v798, 0
        %801 = vmatpush.msra.mxu0 0.0
        %802 = vmatpush.msra.mxu0 0.0
        %803 = vmatpush.msra.mxu0 0.0
        %804 = vmatpush.msra.mxu0 0.0
        %805 = vmatpush.msra.mxu0 0.0
        %806 = vmatpush.msra.mxu0 0.0
        %807 = vmatpush.msra.mxu0 0.0
        %808 = vmatpush.msra.mxu0 0.0
        %809 = vmatpush.msra.mxu0 0.0
        %810 = vmatpush.msra.mxu0 0.0
        %811 = vmatpush.msra.mxu0 0.0
        %812 = vmatpush.msra.mxu0 0.0
        %813 = vmatpush.msra.mxu0 %v627
        %814 = vmatpush.msra.mxu0 %v626
        %815 = vmatpush.msra.mxu0 %v625
        %816 = vmatpush.msra.mxu0 %v624
        %817 = vmatmul.f32.gmra.mxu0 %v799
        %v818 = vpop.f32.mrf.mxu0
        %v819 = vadd.f32 0.0, %v818
        %820 = vdwg.mxu0
        %v821 = vadd.f32 %v796, %v819
        %822 = vst [vmem:[%s232 + $0x8] sm:$0xff] %v821
        %823 = vrot.lane.b32.xlu0 %v603, 64
        %v824 = vpop.permute.xlu0 %823
        %v825 = vsel %vm628, %v824, 0
        %827 = vmatpush.msra.mxu0 0.0
        %828 = vmatpush.msra.mxu0 0.0
        %829 = vmatpush.msra.mxu0 0.0
        %830 = vmatpush.msra.mxu0 0.0
        %831 = vmatpush.msra.mxu0 0.0
        %832 = vmatpush.msra.mxu0 0.0
        %833 = vmatpush.msra.mxu0 0.0
        %834 = vmatpush.msra.mxu0 0.0
        %835 = vmatpush.msra.mxu0 0.0
        %836 = vmatpush.msra.mxu0 0.0
        %837 = vmatpush.msra.mxu0 0.0
        %838 = vmatpush.msra.mxu0 0.0
        %839 = vmatpush.msra.mxu0 %v617
        %840 = vmatpush.msra.mxu0 %v616
        %841 = vmatpush.msra.mxu0 %v615
        %842 = vmatpush.msra.mxu0 %v614
        %843 = vmatmul.f32.gmra.mxu0 %v825
        %v844 = vpop.f32.mrf.mxu0
        %v845 = vadd.f32 0.0, %v844
        %846 = vdwg.mxu0
        %847 = vrot.lane.b32.xlu0 %v601, 64
        %v848 = vpop.permute.xlu0 %847
        %v849 = vsel %vm628, %v848, 0
        %851 = vmatpush.msra.mxu0 0.0
        %852 = vmatpush.msra.mxu0 0.0
        %853 = vmatpush.msra.mxu0 0.0
        %854 = vmatpush.msra.mxu0 0.0
        %855 = vmatpush.msra.mxu0 0.0
        %856 = vmatpush.msra.mxu0 0.0
        %857 = vmatpush.msra.mxu0 0.0
        %858 = vmatpush.msra.mxu0 0.0
        %859 = vmatpush.msra.mxu0 0.0
        %860 = vmatpush.msra.mxu0 0.0
        %861 = vmatpush.msra.mxu0 0.0
        %862 = vmatpush.msra.mxu0 0.0
        %863 = vmatpush.msra.mxu0 %v612
        %864 = vmatpush.msra.mxu0 %v611
        %865 = vmatpush.msra.mxu0 %v610
        %866 = vmatpush.msra.mxu0 %v609
        %867 = vmatmul.f32.gmra.mxu0 %v849
        %v868 = vpop.f32.mrf.mxu0
        %v869 = vadd.f32 %v845, %v868
        %870 = vdwg.mxu0
        %871 = vrot.lane.b32.xlu0 %v605, 64
        %v872 = vpop.permute.xlu0 %871
        %v873 = vsel %vm628, %v872, 0
        %875 = vmatpush.msra.mxu0 0.0
        %876 = vmatpush.msra.mxu0 0.0
        %877 = vmatpush.msra.mxu0 0.0
        %878 = vmatpush.msra.mxu0 0.0
        %879 = vmatpush.msra.mxu0 0.0
        %880 = vmatpush.msra.mxu0 0.0
        %881 = vmatpush.msra.mxu0 0.0
        %882 = vmatpush.msra.mxu0 0.0
        %883 = vmatpush.msra.mxu0 0.0
        %884 = vmatpush.msra.mxu0 0.0
        %885 = vmatpush.msra.mxu0 0.0
        %886 = vmatpush.msra.mxu0 0.0
        %887 = vmatpush.msra.mxu0 %v622
        %888 = vmatpush.msra.mxu0 %v621
        %889 = vmatpush.msra.mxu0 %v620
        %890 = vmatpush.msra.mxu0 %v619
        %891 = vmatmul.f32.gmra.mxu0 %v873
        %v892 = vpop.f32.mrf.mxu0
        %v893 = vadd.f32 0.0, %v892
        %894 = vdwg.mxu0
        %v895 = vadd.f32 %v869, %v893
        %896 = vrot.lane.b32.xlu0 %v607, 64
        %v897 = vpop.permute.xlu0 %896
        %v898 = vsel %vm628, %v897, 0
        %900 = vmatpush.msra.mxu0 0.0
        %901 = vmatpush.msra.mxu0 0.0
        %902 = vmatpush.msra.mxu0 0.0
        %903 = vmatpush.msra.mxu0 0.0
        %904 = vmatpush.msra.mxu0 0.0
        %905 = vmatpush.msra.mxu0 0.0
        %906 = vmatpush.msra.mxu0 0.0
        %907 = vmatpush.msra.mxu0 0.0
        %908 = vmatpush.msra.mxu0 0.0
        %909 = vmatpush.msra.mxu0 0.0
        %910 = vmatpush.msra.mxu0 0.0
        %911 = vmatpush.msra.mxu0 0.0
        %912 = vmatpush.msra.mxu0 %v627
        %913 = vmatpush.msra.mxu0 %v626
        %914 = vmatpush.msra.mxu0 %v625
        %915 = vmatpush.msra.mxu0 %v624
        %916 = vmatmul.f32.gmra.mxu0 %v898
        %v917 = vpop.f32.mrf.mxu0
        %v918 = vadd.f32 0.0, %v917
        %919 = vdwg.mxu0
        %v920 = vadd.f32 %v895, %v918
        %921 = vst [vmem:[%s232 + $0x10] sm:$0xff] %v920
        %922 = vrot.lane.b32.xlu0 %v603, 32
        %v923 = vpop.permute.xlu0 %922
        %v924 = vsel %vm628, %v923, 0
        %926 = vmatpush.msra.mxu0 0.0
        %927 = vmatpush.msra.mxu0 0.0
        %928 = vmatpush.msra.mxu0 0.0
        %929 = vmatpush.msra.mxu0 0.0
        %930 = vmatpush.msra.mxu0 0.0
        %931 = vmatpush.msra.mxu0 0.0
        %932 = vmatpush.msra.mxu0 0.0
        %933 = vmatpush.msra.mxu0 0.0
        %934 = vmatpush.msra.mxu0 0.0
        %935 = vmatpush.msra.mxu0 0.0
        %936 = vmatpush.msra.mxu0 0.0
        %937 = vmatpush.msra.mxu0 0.0
        %938 = vmatpush.msra.mxu0 %v617
        %939 = vmatpush.msra.mxu0 %v616
        %940 = vmatpush.msra.mxu0 %v615
        %941 = vmatpush.msra.mxu0 %v614
        %942 = vmatmul.f32.gmra.mxu0 %v924
        %v943 = vpop.f32.mrf.mxu0
        %v944 = vadd.f32 0.0, %v943
        %945 = vdwg.mxu0
        %946 = vrot.lane.b32.xlu0 %v601, 32
        %v947 = vpop.permute.xlu0 %946
        %v948 = vsel %vm628, %v947, 0
        %950 = vmatpush.msra.mxu0 0.0
        %951 = vmatpush.msra.mxu0 0.0
        %952 = vmatpush.msra.mxu0 0.0
        %953 = vmatpush.msra.mxu0 0.0
        %954 = vmatpush.msra.mxu0 0.0
        %955 = vmatpush.msra.mxu0 0.0
        %956 = vmatpush.msra.mxu0 0.0
        %957 = vmatpush.msra.mxu0 0.0
        %958 = vmatpush.msra.mxu0 0.0
        %959 = vmatpush.msra.mxu0 0.0
        %960 = vmatpush.msra.mxu0 0.0
        %961 = vmatpush.msra.mxu0 0.0
        %962 = vmatpush.msra.mxu0 %v612
        %963 = vmatpush.msra.mxu0 %v611
        %964 = vmatpush.msra.mxu0 %v610
        %965 = vmatpush.msra.mxu0 %v609
        %966 = vmatmul.f32.gmra.mxu0 %v948
        %v967 = vpop.f32.mrf.mxu0
        %v968 = vadd.f32 %v944, %v967
        %969 = vdwg.mxu0
        %970 = vrot.lane.b32.xlu0 %v605, 32
        %v971 = vpop.permute.xlu0 %970
        %v972 = vsel %vm628, %v971, 0
        %974 = vmatpush.msra.mxu0 0.0
        %975 = vmatpush.msra.mxu0 0.0
        %976 = vmatpush.msra.mxu0 0.0
        %977 = vmatpush.msra.mxu0 0.0
        %978 = vmatpush.msra.mxu0 0.0
        %979 = vmatpush.msra.mxu0 0.0
        %980 = vmatpush.msra.mxu0 0.0
        %981 = vmatpush.msra.mxu0 0.0
        %982 = vmatpush.msra.mxu0 0.0
        %983 = vmatpush.msra.mxu0 0.0
        %984 = vmatpush.msra.mxu0 0.0
        %985 = vmatpush.msra.mxu0 0.0
        %986 = vmatpush.msra.mxu0 %v622
        %987 = vmatpush.msra.mxu0 %v621
        %988 = vmatpush.msra.mxu0 %v620
        %989 = vmatpush.msra.mxu0 %v619
        %990 = vmatmul.f32.gmra.mxu0 %v972
        %v991 = vpop.f32.mrf.mxu0
        %v992 = vadd.f32 0.0, %v991
        %993 = vdwg.mxu0
        %v994 = vadd.f32 %v968, %v992
        %995 = vrot.lane.b32.xlu0 %v607, 32
        %v996 = vpop.permute.xlu0 %995
        %v997 = vsel %vm628, %v996, 0
        %999 = vmatpush.msra.mxu0 0.0
        %1000 = vmatpush.msra.mxu0 0.0
        %1001 = vmatpush.msra.mxu0 0.0
        %1002 = vmatpush.msra.mxu0 0.0
        %1003 = vmatpush.msra.mxu0 0.0
        %1004 = vmatpush.msra.mxu0 0.0
        %1005 = vmatpush.msra.mxu0 0.0
        %1006 = vmatpush.msra.mxu0 0.0
        %1007 = vmatpush.msra.mxu0 0.0
        %1008 = vmatpush.msra.mxu0 0.0
        %1009 = vmatpush.msra.mxu0 0.0
        %1010 = vmatpush.msra.mxu0 0.0
        %1011 = vmatpush.msra.mxu0 %v627
        %1012 = vmatpush.msra.mxu0 %v626
        %1013 = vmatpush.msra.mxu0 %v625
        %1014 = vmatpush.msra.mxu0 %v624
        %1015 = vmatmul.f32.gmra.mxu0 %v997
        %v1016 = vpop.f32.mrf.mxu0
        %v1017 = vadd.f32 0.0, %v1016
        %1018 = vdwg.mxu0
        %v1019 = vadd.f32 %v994, %v1017
        %1020 = vst [vmem:[%s232 + $0x18] sm:$0xff] %v1019
        %v1022 = vsel %vm628, %v604, 0
        %1024 = vmatpush.msra.mxu0 0.0
        %1025 = vmatpush.msra.mxu0 0.0
        %1026 = vmatpush.msra.mxu0 0.0
        %1027 = vmatpush.msra.mxu0 0.0
        %1028 = vmatpush.msra.mxu0 0.0
        %1029 = vmatpush.msra.mxu0 0.0
        %1030 = vmatpush.msra.mxu0 0.0
        %1031 = vmatpush.msra.mxu0 0.0
        %1032 = vmatpush.msra.mxu0 0.0
        %1033 = vmatpush.msra.mxu0 0.0
        %1034 = vmatpush.msra.mxu0 0.0
        %1035 = vmatpush.msra.mxu0 0.0
        %1036 = vmatpush.msra.mxu0 %v617
        %1037 = vmatpush.msra.mxu0 %v616
        %1038 = vmatpush.msra.mxu0 %v615
        %1039 = vmatpush.msra.mxu0 %v614
        %1040 = vmatmul.f32.gmra.mxu0 %v1022
        %v1041 = vpop.f32.mrf.mxu0
        %v1042 = vadd.f32 0.0, %v1041
        %1043 = vdwg.mxu0
        %v1045 = vsel %vm628, %v602, 0
        %1047 = vmatpush.msra.mxu0 0.0
        %1048 = vmatpush.msra.mxu0 0.0
        %1049 = vmatpush.msra.mxu0 0.0
        %1050 = vmatpush.msra.mxu0 0.0
        %1051 = vmatpush.msra.mxu0 0.0
        %1052 = vmatpush.msra.mxu0 0.0
        %1053 = vmatpush.msra.mxu0 0.0
        %1054 = vmatpush.msra.mxu0 0.0
        %1055 = vmatpush.msra.mxu0 0.0
        %1056 = vmatpush.msra.mxu0 0.0
        %1057 = vmatpush.msra.mxu0 0.0
        %1058 = vmatpush.msra.mxu0 0.0
        %1059 = vmatpush.msra.mxu0 %v612
        %1060 = vmatpush.msra.mxu0 %v611
        %1061 = vmatpush.msra.mxu0 %v610
        %1062 = vmatpush.msra.mxu0 %v609
        %1063 = vmatmul.f32.gmra.mxu0 %v1045
        %v1064 = vpop.f32.mrf.mxu0
        %v1065 = vadd.f32 %v1042, %v1064
        %1066 = vdwg.mxu0
        %v1068 = vsel %vm628, %v606, 0
        %1070 = vmatpush.msra.mxu0 0.0
        %1071 = vmatpush.msra.mxu0 0.0
        %1072 = vmatpush.msra.mxu0 0.0
        %1073 = vmatpush.msra.mxu0 0.0
        %1074 = vmatpush.msra.mxu0 0.0
        %1075 = vmatpush.msra.mxu0 0.0
        %1076 = vmatpush.msra.mxu0 0.0
        %1077 = vmatpush.msra.mxu0 0.0
        %1078 = vmatpush.msra.mxu0 0.0
        %1079 = vmatpush.msra.mxu0 0.0
        %1080 = vmatpush.msra.mxu0 0.0
        %1081 = vmatpush.msra.mxu0 0.0
        %1082 = vmatpush.msra.mxu0 %v622
        %1083 = vmatpush.msra.mxu0 %v621
        %1084 = vmatpush.msra.mxu0 %v620
        %1085 = vmatpush.msra.mxu0 %v619
        %1086 = vmatmul.f32.gmra.mxu0 %v1068
        %v1087 = vpop.f32.mrf.mxu0
        %v1088 = vadd.f32 0.0, %v1087
        %1089 = vdwg.mxu0
        %v1090 = vadd.f32 %v1065, %v1088
        %v1092 = vsel %vm628, %v608, 0
        %1094 = vmatpush.msra.mxu0 0.0
        %1095 = vmatpush.msra.mxu0 0.0
        %1096 = vmatpush.msra.mxu0 0.0
        %1097 = vmatpush.msra.mxu0 0.0
        %1098 = vmatpush.msra.mxu0 0.0
        %1099 = vmatpush.msra.mxu0 0.0
        %1100 = vmatpush.msra.mxu0 0.0
        %1101 = vmatpush.msra.mxu0 0.0
        %1102 = vmatpush.msra.mxu0 0.0
        %1103 = vmatpush.msra.mxu0 0.0
        %1104 = vmatpush.msra.mxu0 0.0
        %1105 = vmatpush.msra.mxu0 0.0
        %1106 = vmatpush.msra.mxu0 %v627
        %1107 = vmatpush.msra.mxu0 %v626
        %1108 = vmatpush.msra.mxu0 %v625
        %1109 = vmatpush.msra.mxu0 %v624
        %1110 = vmatmul.f32.gmra.mxu0 %v1092
        %v1111 = vpop.f32.mrf.mxu0
        %v1112 = vadd.f32 0.0, %v1111
        %1113 = vdwg.mxu0
        %v1114 = vadd.f32 %v1090, %v1112
        %1115 = vst [vmem:[%s232 + $0x20] sm:$0xff] %v1114
        %1116 = vrot.lane.b32.xlu0 %v604, 96
        %v1117 = vpop.permute.xlu0 %1116
        %v1118 = vsel %vm628, %v1117, 0
        %1120 = vmatpush.msra.mxu0 0.0
        %1121 = vmatpush.msra.mxu0 0.0
        %1122 = vmatpush.msra.mxu0 0.0
        %1123 = vmatpush.msra.mxu0 0.0
        %1124 = vmatpush.msra.mxu0 0.0
        %1125 = vmatpush.msra.mxu0 0.0
        %1126 = vmatpush.msra.mxu0 0.0
        %1127 = vmatpush.msra.mxu0 0.0
        %1128 = vmatpush.msra.mxu0 0.0
        %1129 = vmatpush.msra.mxu0 0.0
        %1130 = vmatpush.msra.mxu0 0.0
        %1131 = vmatpush.msra.mxu0 0.0
        %1132 = vmatpush.msra.mxu0 %v617
        %1133 = vmatpush.msra.mxu0 %v616
        %1134 = vmatpush.msra.mxu0 %v615
        %1135 = vmatpush.msra.mxu0 %v614
        %1136 = vmatmul.f32.gmra.mxu0 %v1118
        %v1137 = vpop.f32.mrf.mxu0
        %v1138 = vadd.f32 0.0, %v1137
        %1139 = vdwg.mxu0
        %1140 = vrot.lane.b32.xlu0 %v602, 96
        %v1141 = vpop.permute.xlu0 %1140
        %v1142 = vsel %vm628, %v1141, 0
        %1144 = vmatpush.msra.mxu0 0.0
        %1145 = vmatpush.msra.mxu0 0.0
        %1146 = vmatpush.msra.mxu0 0.0
        %1147 = vmatpush.msra.mxu0 0.0
        %1148 = vmatpush.msra.mxu0 0.0
        %1149 = vmatpush.msra.mxu0 0.0
        %1150 = vmatpush.msra.mxu0 0.0
        %1151 = vmatpush.msra.mxu0 0.0
        %1152 = vmatpush.msra.mxu0 0.0
        %1153 = vmatpush.msra.mxu0 0.0
        %1154 = vmatpush.msra.mxu0 0.0
        %1155 = vmatpush.msra.mxu0 0.0
        %1156 = vmatpush.msra.mxu0 %v612
        %1157 = vmatpush.msra.mxu0 %v611
        %1158 = vmatpush.msra.mxu0 %v610
        %1159 = vmatpush.msra.mxu0 %v609
        %1160 = vmatmul.f32.gmra.mxu0 %v1142
        %v1161 = vpop.f32.mrf.mxu0
        %v1162 = vadd.f32 %v1138, %v1161
        %1163 = vdwg.mxu0
        %1164 = vrot.lane.b32.xlu0 %v606, 96
        %v1165 = vpop.permute.xlu0 %1164
        %v1166 = vsel %vm628, %v1165, 0
        %1168 = vmatpush.msra.mxu0 0.0
        %1169 = vmatpush.msra.mxu0 0.0
        %1170 = vmatpush.msra.mxu0 0.0
        %1171 = vmatpush.msra.mxu0 0.0
        %1172 = vmatpush.msra.mxu0 0.0
        %1173 = vmatpush.msra.mxu0 0.0
        %1174 = vmatpush.msra.mxu0 0.0
        %1175 = vmatpush.msra.mxu0 0.0
        %1176 = vmatpush.msra.mxu0 0.0
        %1177 = vmatpush.msra.mxu0 0.0
        %1178 = vmatpush.msra.mxu0 0.0
        %1179 = vmatpush.msra.mxu0 0.0
        %1180 = vmatpush.msra.mxu0 %v622
        %1181 = vmatpush.msra.mxu0 %v621
        %1182 = vmatpush.msra.mxu0 %v620
        %1183 = vmatpush.msra.mxu0 %v619
        %1184 = vmatmul.f32.gmra.mxu0 %v1166
        %v1185 = vpop.f32.mrf.mxu0
        %v1186 = vadd.f32 0.0, %v1185
        %1187 = vdwg.mxu0
        %v1188 = vadd.f32 %v1162, %v1186
        %1189 = vrot.lane.b32.xlu0 %v608, 96
        %v1190 = vpop.permute.xlu0 %1189
        %v1191 = vsel %vm628, %v1190, 0
        %1193 = vmatpush.msra.mxu0 0.0
        %1194 = vmatpush.msra.mxu0 0.0
        %1195 = vmatpush.msra.mxu0 0.0
        %1196 = vmatpush.msra.mxu0 0.0
        %1197 = vmatpush.msra.mxu0 0.0
        %1198 = vmatpush.msra.mxu0 0.0
        %1199 = vmatpush.msra.mxu0 0.0
        %1200 = vmatpush.msra.mxu0 0.0
        %1201 = vmatpush.msra.mxu0 0.0
        %1202 = vmatpush.msra.mxu0 0.0
        %1203 = vmatpush.msra.mxu0 0.0
        %1204 = vmatpush.msra.mxu0 0.0
        %1205 = vmatpush.msra.mxu0 %v627
        %1206 = vmatpush.msra.mxu0 %v626
        %1207 = vmatpush.msra.mxu0 %v625
        %1208 = vmatpush.msra.mxu0 %v624
        %1209 = vmatmul.f32.gmra.mxu0 %v1191
        %v1210 = vpop.f32.mrf.mxu0
        %v1211 = vadd.f32 0.0, %v1210
        %1212 = vdwg.mxu0
        %v1213 = vadd.f32 %v1188, %v1211
        %1214 = vst [vmem:[%s232 + $0x28] sm:$0xff] %v1213
        %1215 = vrot.lane.b32.xlu0 %v604, 64
        %v1216 = vpop.permute.xlu0 %1215
        %v1217 = vsel %vm628, %v1216, 0
        %1219 = vmatpush.msra.mxu0 0.0
        %1220 = vmatpush.msra.mxu0 0.0
        %1221 = vmatpush.msra.mxu0 0.0
        %1222 = vmatpush.msra.mxu0 0.0
        %1223 = vmatpush.msra.mxu0 0.0
        %1224 = vmatpush.msra.mxu0 0.0
        %1225 = vmatpush.msra.mxu0 0.0
        %1226 = vmatpush.msra.mxu0 0.0
        %1227 = vmatpush.msra.mxu0 0.0
        %1228 = vmatpush.msra.mxu0 0.0
        %1229 = vmatpush.msra.mxu0 0.0
        %1230 = vmatpush.msra.mxu0 0.0
        %1231 = vmatpush.msra.mxu0 %v617
        %1232 = vmatpush.msra.mxu0 %v616
        %1233 = vmatpush.msra.mxu0 %v615
        %1234 = vmatpush.msra.mxu0 %v614
        %1235 = vmatmul.f32.gmra.mxu0 %v1217
        %v1236 = vpop.f32.mrf.mxu0
        %v1237 = vadd.f32 0.0, %v1236
        %1238 = vdwg.mxu0
        %1239 = vrot.lane.b32.xlu0 %v602, 64
        %v1240 = vpop.permute.xlu0 %1239
        %v1241 = vsel %vm628, %v1240, 0
        %1243 = vmatpush.msra.mxu0 0.0
        %1244 = vmatpush.msra.mxu0 0.0
        %1245 = vmatpush.msra.mxu0 0.0
        %1246 = vmatpush.msra.mxu0 0.0
        %1247 = vmatpush.msra.mxu0 0.0
        %1248 = vmatpush.msra.mxu0 0.0
        %1249 = vmatpush.msra.mxu0 0.0
        %1250 = vmatpush.msra.mxu0 0.0
        %1251 = vmatpush.msra.mxu0 0.0
        %1252 = vmatpush.msra.mxu0 0.0
        %1253 = vmatpush.msra.mxu0 0.0
        %1254 = vmatpush.msra.mxu0 0.0
        %1255 = vmatpush.msra.mxu0 %v612
        %1256 = vmatpush.msra.mxu0 %v611
        %1257 = vmatpush.msra.mxu0 %v610
        %1258 = vmatpush.msra.mxu0 %v609
        %1259 = vmatmul.f32.gmra.mxu0 %v1241
        %v1260 = vpop.f32.mrf.mxu0
        %v1261 = vadd.f32 %v1237, %v1260
        %1262 = vdwg.mxu0
        %1263 = vrot.lane.b32.xlu0 %v606, 64
        %v1264 = vpop.permute.xlu0 %1263
        %v1265 = vsel %vm628, %v1264, 0
        %1267 = vmatpush.msra.mxu0 0.0
        %1268 = vmatpush.msra.mxu0 0.0
        %1269 = vmatpush.msra.mxu0 0.0
        %1270 = vmatpush.msra.mxu0 0.0
        %1271 = vmatpush.msra.mxu0 0.0
        %1272 = vmatpush.msra.mxu0 0.0
        %1273 = vmatpush.msra.mxu0 0.0
        %1274 = vmatpush.msra.mxu0 0.0
        %1275 = vmatpush.msra.mxu0 0.0
        %1276 = vmatpush.msra.mxu0 0.0
        %1277 = vmatpush.msra.mxu0 0.0
        %1278 = vmatpush.msra.mxu0 0.0
        %1279 = vmatpush.msra.mxu0 %v622
        %1280 = vmatpush.msra.mxu0 %v621
        %1281 = vmatpush.msra.mxu0 %v620
        %1282 = vmatpush.msra.mxu0 %v619
        %1283 = vmatmul.f32.gmra.mxu0 %v1265
        %v1284 = vpop.f32.mrf.mxu0
        %v1285 = vadd.f32 0.0, %v1284
        %1286 = vdwg.mxu0
        %v1287 = vadd.f32 %v1261, %v1285
        %1288 = vrot.lane.b32.xlu0 %v608, 64
        %v1289 = vpop.permute.xlu0 %1288
        %v1290 = vsel %vm628, %v1289, 0
        %1292 = vmatpush.msra.mxu0 0.0
        %1293 = vmatpush.msra.mxu0 0.0
        %1294 = vmatpush.msra.mxu0 0.0
        %1295 = vmatpush.msra.mxu0 0.0
        %1296 = vmatpush.msra.mxu0 0.0
        %1297 = vmatpush.msra.mxu0 0.0
        %1298 = vmatpush.msra.mxu0 0.0
        %1299 = vmatpush.msra.mxu0 0.0
        %1300 = vmatpush.msra.mxu0 0.0
        %1301 = vmatpush.msra.mxu0 0.0
        %1302 = vmatpush.msra.mxu0 0.0
        %1303 = vmatpush.msra.mxu0 0.0
        %1304 = vmatpush.msra.mxu0 %v627
        %1305 = vmatpush.msra.mxu0 %v626
        %1306 = vmatpush.msra.mxu0 %v625
        %1307 = vmatpush.msra.mxu0 %v624
        %1308 = vmatmul.f32.gmra.mxu0 %v1290
        %v1309 = vpop.f32.mrf.mxu0
        %v1310 = vadd.f32 0.0, %v1309
        %1311 = vdwg.mxu0
        %v1312 = vadd.f32 %v1287, %v1310
        %1313 = vst [vmem:[%s232 + $0x30] sm:$0xff] %v1312
        %1314 = vrot.lane.b32.xlu0 %v604, 32
        %v1315 = vpop.permute.xlu0 %1314
        %v1316 = vsel %vm628, %v1315, 0
        %1318 = vmatpush.msra.mxu0 0.0
        %1319 = vmatpush.msra.mxu0 0.0
        %1320 = vmatpush.msra.mxu0 0.0
        %1321 = vmatpush.msra.mxu0 0.0
        %1322 = vmatpush.msra.mxu0 0.0
        %1323 = vmatpush.msra.mxu0 0.0
        %1324 = vmatpush.msra.mxu0 0.0
        %1325 = vmatpush.msra.mxu0 0.0
        %1326 = vmatpush.msra.mxu0 0.0
        %1327 = vmatpush.msra.mxu0 0.0
        %1328 = vmatpush.msra.mxu0 0.0
        %1329 = vmatpush.msra.mxu0 0.0
        %1330 = vmatpush.msra.mxu0 %v617
        %1331 = vmatpush.msra.mxu0 %v616
        %1332 = vmatpush.msra.mxu0 %v615
        %1333 = vmatpush.msra.mxu0 %v614
        %1334 = vmatmul.f32.gmra.mxu0 %v1316
        %v1335 = vpop.f32.mrf.mxu0
        %v1336 = vadd.f32 0.0, %v1335
        %1337 = vdwg.mxu0
        %1338 = vrot.lane.b32.xlu0 %v602, 32
        %v1339 = vpop.permute.xlu0 %1338
        %v1340 = vsel %vm628, %v1339, 0
        %1342 = vmatpush.msra.mxu0 0.0
        %1343 = vmatpush.msra.mxu0 0.0
        %1344 = vmatpush.msra.mxu0 0.0
        %1345 = vmatpush.msra.mxu0 0.0
        %1346 = vmatpush.msra.mxu0 0.0
        %1347 = vmatpush.msra.mxu0 0.0
        %1348 = vmatpush.msra.mxu0 0.0
        %1349 = vmatpush.msra.mxu0 0.0
        %1350 = vmatpush.msra.mxu0 0.0
        %1351 = vmatpush.msra.mxu0 0.0
        %1352 = vmatpush.msra.mxu0 0.0
        %1353 = vmatpush.msra.mxu0 0.0
        %1354 = vmatpush.msra.mxu0 %v612
        %1355 = vmatpush.msra.mxu0 %v611
        %1356 = vmatpush.msra.mxu0 %v610
        %1357 = vmatpush.msra.mxu0 %v609
        %1358 = vmatmul.f32.gmra.mxu0 %v1340
        %v1359 = vpop.f32.mrf.mxu0
        %v1360 = vadd.f32 %v1336, %v1359
        %1361 = vdwg.mxu0
        %1362 = vrot.lane.b32.xlu0 %v606, 32
        %v1363 = vpop.permute.xlu0 %1362
        %v1364 = vsel %vm628, %v1363, 0
        %1366 = vmatpush.msra.mxu0 0.0
        %1367 = vmatpush.msra.mxu0 0.0
        %1368 = vmatpush.msra.mxu0 0.0
        %1369 = vmatpush.msra.mxu0 0.0
        %1370 = vmatpush.msra.mxu0 0.0
        %1371 = vmatpush.msra.mxu0 0.0
        %1372 = vmatpush.msra.mxu0 0.0
        %1373 = vmatpush.msra.mxu0 0.0
        %1374 = vmatpush.msra.mxu0 0.0
        %1375 = vmatpush.msra.mxu0 0.0
        %1376 = vmatpush.msra.mxu0 0.0
        %1377 = vmatpush.msra.mxu0 0.0
        %1378 = vmatpush.msra.mxu0 %v622
        %1379 = vmatpush.msra.mxu0 %v621
        %1380 = vmatpush.msra.mxu0 %v620
        %1381 = vmatpush.msra.mxu0 %v619
        %1382 = vmatmul.f32.gmra.mxu0 %v1364
        %v1383 = vpop.f32.mrf.mxu0
        %v1384 = vadd.f32 0.0, %v1383
        %1385 = vdwg.mxu0
        %v1386 = vadd.f32 %v1360, %v1384
        %1387 = vrot.lane.b32.xlu0 %v608, 32
        %v1388 = vpop.permute.xlu0 %1387
        %v1389 = vsel %vm628, %v1388, 0
        %1391 = vmatpush.msra.mxu0 0.0
        %1392 = vmatpush.msra.mxu0 0.0
        %1393 = vmatpush.msra.mxu0 0.0
        %1394 = vmatpush.msra.mxu0 0.0
        %1395 = vmatpush.msra.mxu0 0.0
        %1396 = vmatpush.msra.mxu0 0.0
        %1397 = vmatpush.msra.mxu0 0.0
        %1398 = vmatpush.msra.mxu0 0.0
        %1399 = vmatpush.msra.mxu0 0.0
        %1400 = vmatpush.msra.mxu0 0.0
        %1401 = vmatpush.msra.mxu0 0.0
        %1402 = vmatpush.msra.mxu0 0.0
        %1403 = vmatpush.msra.mxu0 %v627
        %1404 = vmatpush.msra.mxu0 %v626
        %1405 = vmatpush.msra.mxu0 %v625
        %1406 = vmatpush.msra.mxu0 %v624
        %1407 = vmatmul.f32.gmra.mxu0 %v1389
        %v1408 = vpop.f32.mrf.mxu0
        %v1409 = vadd.f32 0.0, %v1408
        %1410 = vdwg.mxu0
        %v1411 = vadd.f32 %v1386, %v1409
        %1412 = vst [vmem:[%s232 + $0x38] sm:$0xff] %v1411
        %s1413 = sand.u32 %s119, 1
        %s1414 = scalar_lea.sflag [#allocation6], %s1413
        %s1415 = sand.u32 %s119, 1
        %s1416 = smul.addr %s1415, 64
        %s1417 = scalar_lea.vmem [#allocation9], %s1416
        // Predicated region
        $region45: #{tpu_custom_call.1} parent=35 // pred_check
          %p1418 = pneg %p129
        $region46: #{tpu_custom_call.1} parent=35 // pred_check_branch
          %1420 = sbr.rel (%p1418) target = $region48
        $region47: #{tpu_custom_call.1} parent=35 // pred_region
          %1422 = vsyncadd %s1414, 0
          %s1423 = smul.addr %s22, 8
          %s1424 = smul.addr %s1423, 8
          %s1425 = scalar_lea.hbm %s4, %s1424
          %s1427 = sshll.u32 %s1417, 4
          %s1428 = int_to_ptr.vmem [resolvable:$true] %s1427
          %s1429 = sshll.u32 %s1425, 4
          %s1430 = int_to_ptr.hbm [resolvable:$true] %s1429
          %1432 = dma.vmem_to_hbm [thread:$0]  %s1428, 1024, %s1430, %s1414
        $region48: #{tpu_custom_call.1} parent=35 // pred_fallthru
          _
      $region36: #{tpu_custom_call.1} parent=5 // pred_fallthru
        _
      %p1433 = scmp.le.s32.totalorder 2, %s17
      // Predicated region
      $region49: #{tpu_custom_call.1} parent=5 // pred_check
        %p1434 = pneg %p1433
      $region50: #{tpu_custom_call.1} parent=5 // pred_check_branch
        %1436 = sbr.rel (%p1434) target = $region52
      $region51: #{tpu_custom_call.1} parent=5 // pred_region
        %s1437 = ssub.s32 %s17, 2
        // Predicated region
        $region53: #{tpu_custom_call.1} parent=51 // pred_check
          %p1438 = pneg %p135
        $region54: #{tpu_custom_call.1} parent=51 // pred_check_branch
          %1440 = sbr.rel (%p1438) target = $region56
        $region55: #{tpu_custom_call.1} parent=51 // pred_region
          %s1441 = sand.u32 %s120, 1
          %s1442 = scalar_lea.sflag [#allocation6], %s1441
          %s1443 = sand.u32 %s120, 1
          %s1444 = smul.addr %s1443, 64
          %s1445 = scalar_lea.vmem [#allocation9], %s1444
          %1447 = dma.done %s1442, 1024
        $region56: #{tpu_custom_call.1} parent=51 // pred_fallthru
          _
      $region52: #{tpu_custom_call.1} parent=5 // pred_fallthru
        _
    $region6: #{tpu_custom_call.1} parent=1 // loop_footer
      %s21 = sadd.s32 1, %s17
    $region7: #{tpu_custom_call.1} parent=1 // loop_footer_branch
      %16 = sbr.rel target = $region3
    $region8: #{tpu_custom_call.1} parent=1 // loop_exit
      _
    %1448 = vsyncpa [#allocation5], 1
    %s1449 = scalar_lea.sflag [#allocation5], 1
    %1450 = vsyncpa %s1449, 1
    %1451 = vsyncpa [#allocation8], 1
    %1452 = vsyncpa [#allocation6], 1
    %s1453 = scalar_lea.sflag [#allocation6], 1
    %1454 = vsyncpa %s1453, 1

</llo_original>
